<compile_context>
chip_gen: v7x
topology: tpu7x:2x2x1
jax: 0.10.0
libtpu: 0.0.40
codegen_flags: <defaults>
</compile_context>

<pallas_src>
import functools
import math

import numpy as np
import jax
import jax.numpy as jnp
from jax.experimental import pallas as pl
from jax.experimental.pallas import tpu as pltpu


# ----------------------------------------------------------------------------
# Pallas kernel: one grid step = n stacked (batch*group) slices, (nc, hwp) tile.
# ----------------------------------------------------------------------------
def ema_kernel(x_ref, w1_ref, b1_ref, w3_ref, b3_ref, gamma_ref, beta_ref,
               a_ref, bsum_ref, pool_ref, eh_ref, ew_ref, masks_ref, valid_ref,
               o_ref, *, eps, width, hw_valid, mxu_dtype):
    f32 = jnp.float32
    nc, hwp = x_ref.shape

    gx = x_ref[...]                        # (nc, hwp) f32 copy for VPU math
    gx_mx = gx.astype(mxu_dtype)           # MXU streaming operand (bf16 option)
    valid = valid_ref[...]                 # (hwp, 1): 1.0 on real lanes, 0 on pad

    # ---- directional avg pools fused: one dot against [Ph | Pw] -------------
    x_hw = jnp.dot(gx_mx, pool_ref[...], preferred_element_type=f32)   # (nc, h+w)

    # ---- shared 1x1 conv on [x_h | x_w] + sigmoid gates (small-K, f32) ------
    sig = jax.nn.sigmoid(
        jnp.dot(w1_ref[...], x_hw, preferred_element_type=f32) + b1_ref[...])
    sig_mx = sig.astype(mxu_dtype)
    gate = (jnp.dot(sig_mx, eh_ref[...], preferred_element_type=f32) *
            jnp.dot(sig_mx, ew_ref[...], preferred_element_type=f32))  # (nc, hwp)
    gated = gx * gate                      # exactly zero on padded lanes

    # ---- GroupNorm(groups, cg): sums on the MXU via the valid-lane column ---
    a = a_ref[...]
    mean_c = jnp.dot(a, jnp.dot(gated, valid, preferred_element_type=f32),
                     preferred_element_type=f32)                # (nc, 1)
    dev = gated - mean_c                   # junk (-mean) on padded lanes; always
    var_c = jnp.dot(a, jnp.dot(dev * dev, valid, preferred_element_type=f32),
                    preferred_element_type=f32)                 # masked by `valid`
    scale_c = jax.lax.rsqrt(var_c + eps) * gamma_ref[...]       # fold gamma in
    x1 = dev * scale_c + beta_ref[...]     # (junk on padded lanes -> masked later)

    # ---- 3x3 conv (padding=1): 9 rolled+masked taps, ONE fused matmul -------
    taps = []
    for k in range(9):
        dy, dx = k // 3 - 1, k % 3 - 1
        d = dy * width + dx
        shifted = gx_mx if d == 0 else pltpu.roll(gx_mx, shift=(-d) % hwp, axis=1)
        taps.append(shifted * masks_ref[pl.ds(k, 1), :])
    taps = jnp.concatenate(taps, axis=0)                        # (9*nc, hwp)
    x2 = jnp.dot(w3_ref[...], taps, preferred_element_type=f32) + b3_ref[...]

    # ---- spatial means (MXU) + per-slice softmax over channels (f32) --------
    inv_hw = 1.0 / float(hw_valid)
    m1 = jnp.dot(x1, valid, preferred_element_type=f32) * inv_hw    # (nc, 1)
    m2 = jnp.dot(x2, valid, preferred_element_type=f32) * inv_hw
    bsum = bsum_ref[...]
    # The max is global over the stacked slices; softmax is shift-invariant per
    # slice, so this is exact (a shared numerical-stability shift).
    e1 = jnp.exp(m1 - jnp.max(m1, axis=0, keepdims=True))
    e2 = jnp.exp(m2 - jnp.max(m2, axis=0, keepdims=True))
    x11 = e1 / jnp.dot(bsum, e1, preferred_element_type=f32)
    x21 = e2 / jnp.dot(bsum, e2, preferred_element_type=f32)

    # ---- cross weighting, summed per slice, broadcast back over channels ----
    z = x11 * x2 + x21 * x1                                     # (nc, hwp)
    wts = jnp.dot(bsum.astype(mxu_dtype), z.astype(mxu_dtype),
                  preferred_element_type=f32)
    o_ref[...] = (gx * jax.nn.sigmoid(wts)).astype(o_ref.dtype)


# ----------------------------------------------------------------------------
# Wrapper
# ----------------------------------------------------------------------------
def ema_pallas(x, params, groups, eps=1e-5, mxu_dtype=jnp.bfloat16,
               slices_per_step=None):
    b, c, h, w = x.shape
    assert c % groups == 0
    cg = c // groups
    assert cg > 0 and cg % groups == 0, "GroupNorm(groups, cg) needs cg % groups == 0"
    bg = b * groups
    hw = h * w
    hwp = max(128, -(-hw // 128) * 128)                # lane-dense last dim
    f32 = jnp.float32

    # ---- slices-per-step: fill the MXU contraction (target nc ~ 256 rows) but
    #      cap by a VMEM budget (~24 live (nc,hwp) f32 slabs per step including
    #      the 9-tap stack, double-buffered I/O and temporaries) -> v7x-safe.
    row_align = 16 if mxu_dtype == jnp.bfloat16 else 8
    if slices_per_step is None:
        vmem_budget = 12 << 20
        cap_rows = max(row_align, vmem_budget // (hwp * 4 * 24))
        per_step_rows = min(256, cap_rows)
        n = max(1, min(bg, max(1, per_step_rows // cg)))
    else:
        n = int(slices_per_step)
    n_align = (row_align * cg // math.gcd(row_align, cg)) // cg   # nc % row_align == 0
    n = -(-n // n_align) * n_align
    nc = n * cg

    steps = -(-bg // n)
    if steps > 1 and steps % 2 == 1:
        steps += 1                        # even grid so both v7x TensorCores stay busy
    bg_pad = steps * n
    rows = bg_pad * cg
    grid = (steps,)

    # ---- input rows: (b*c, hw), slice-major then channel; pad only if needed
    x2d = x.reshape(b * c, hw).astype(f32)
    pad_r, pad_l = rows - b * c, hwp - hw
    if pad_r or pad_l:
        x2d = jnp.pad(x2d, ((0, pad_r), (0, pad_l)))

    # ---- small constant helper matrices -------------------------------------
    pidx = np.arange(hw)
    ys, xs = pidx // w, pidx % w
    pool = np.zeros((hwp, h + w), np.float32)          # [Ph | Pw]
    pool[pidx, ys] = 1.0 / w                           # avg over W -> x_h part
    pool[pidx, h + xs] = 1.0 / h                       # avg over H -> x_w part
    eh = np.zeros((h + w, hwp), np.float32)            # broadcast x_h over W
    eh[ys, pidx] = 1.0
    ew = np.zeros((h + w, hwp), np.float32)            # broadcast x_w over H
    ew[h + xs, pidx] = 1.0

    masks = np.zeros((9, hwp), np.float32)             # 3x3 tap boundary masks
    for k in range(9):
        dy, dx = k // 3 - 1, k % 3 - 1
        ok = (ys + dy >= 0) & (ys + dy < h) & (xs + dx >= 0) & (xs + dx < w)
        masks[k, :hw] = ok.astype(np.float32)
    valid = np.zeros((hwp, 1), np.float32)             # valid-lane column
    valid[:hw, 0] = 1.0

    # ---- block-diagonal (across the n stacked slices) parameter matrices ----
    eye_n = jnp.eye(n, dtype=f32)

    def blockdiag(m):                                  # (cg, cg) -> (nc, nc)
        return jnp.einsum("ab,ij->aibj", eye_n, jnp.asarray(m, f32)).reshape(nc, nc)

    def tile_col(v):                                   # (cg,) -> (nc, 1)
        return jnp.tile(jnp.asarray(v, f32).reshape(cg, 1), (n, 1))

    w1_big = blockdiag(params["w1"])
    b1_big = tile_col(params["b1"])
    # conv3x3 weights (O,I,3,3) -> per-tap (cg,cg), k = kh*3+kw, stacked along K
    w3_taps = jnp.transpose(jnp.asarray(params["w3"], f32), (2, 3, 0, 1)).reshape(9, cg, cg)
    w3_big = jnp.concatenate([blockdiag(w3_taps[k]) for k in range(9)], axis=1)
    b3_big = tile_col(params["b3"])
    gamma_big = tile_col(params["gamma"])
    beta_big = tile_col(params["beta"])

    cpg = cg // groups
    gidx = np.arange(cg) // cpg
    a_slice = (gidx[:, None] == gidx[None, :]).astype(np.float32) / float(cpg * hw)
    a_big = blockdiag(a_slice)                         # GroupNorm group-mean map
    bsum_big = blockdiag(np.ones((cg, cg), np.float32))  # per-slice all-ones

    # Heavy streamed MXU operands optionally in bf16 (stats / softmax stay f32).
    mx = lambda v: jnp.asarray(v).astype(mxu_dtype)

    def const_spec(shape):
        zeros = (0,) * len(shape)
        return pl.BlockSpec(shape, lambda i, _z=zeros: _z)

    out2d = pl.pallas_call(
        functools.partial(ema_kernel, eps=eps, width=w, hw_valid=hw,
                          mxu_dtype=mxu_dtype),
        out_shape=jax.ShapeDtypeStruct((rows, hwp), f32),
        grid_spec=pltpu.PrefetchScalarGridSpec(
            num_scalar_prefetch=0,
            grid=grid,
            in_specs=[
                pl.BlockSpec((nc, hwp), lambda i: (i, 0)),   # x (stacked slices)
                const_spec((nc, nc)),        # w1 (block-diag 1x1 conv)
                const_spec((nc, 1)),         # b1
                const_spec((nc, 9 * nc)),    # w3 (9 taps stacked along K)
                const_spec((nc, 1)),         # b3
                const_spec((nc, 1)),         # gamma
                const_spec((nc, 1)),         # beta
                const_spec((nc, nc)),        # A (GroupNorm group-mean map)
                const_spec((nc, nc)),        # per-slice all-ones
                const_spec((hwp, h + w)),    # [Ph | Pw] fused pool
                const_spec((h + w, hwp)),    # Eh (zero rows for W part)
                const_spec((h + w, hwp)),    # Ew (zero rows for H part)
                const_spec((9, hwp)),        # conv-tap boundary masks
                const_spec((hwp, 1)),        # valid-lane column
            ],
            out_specs=pl.BlockSpec((nc, hwp), lambda i: (i, 0)),
        ),
        compiler_params=pltpu.CompilerParams(
            dimension_semantics=("parallel",),
            vmem_limit_bytes=32 * 1024 * 1024,
        ),
    )(x2d, w1_big, b1_big, mx(w3_big), b3_big, gamma_big, beta_big,
      a_big, bsum_big, mx(pool), mx(eh), mx(ew), mx(masks), jnp.asarray(valid))

    if pad_r or pad_l:
        out2d = out2d[:b * c, :hw]
    return out2d.reshape(b, c, h, w)


# ----------------------------------------------------------------------------
# Pure-JAX reference (mirrors the PyTorch forward, NCHW).
# ----------------------------------------------------------------------------
def ema_reference(x, params, groups, eps=1e-5):
    b, c, h, w = x.shape
    cg = c // groups
    bg = b * groups
    gx = x.reshape(bg, cg, h, w)

    x_h = jnp.mean(gx, axis=3, keepdims=True)                    # (bg,cg,h,1)
    x_w = jnp.mean(gx, axis=2, keepdims=True)                    # (bg,cg,1,w)
    x_w_p = jnp.transpose(x_w, (0, 1, 3, 2))                     # (bg,cg,w,1)
    cat = jnp.concatenate([x_h, x_w_p], axis=2)                  # (bg,cg,h+w,1)
    hw_ = jnp.einsum("oi,bisz->bosz", params["w1"], cat) + \
        params["b1"][None, :, None, None]
    xh, xw = hw_[:, :, :h, :], hw_[:, :, h:, :]
    xw = jnp.transpose(xw, (0, 1, 3, 2))
    gated = gx * jax.nn.sigmoid(xh) * jax.nn.sigmoid(xw)

    gg = gated.reshape(bg, groups, cg // groups, h, w)
    mean = jnp.mean(gg, axis=(2, 3, 4), keepdims=True)
    var = jnp.mean((gg - mean) ** 2, axis=(2, 3, 4), keepdims=True)
    x1 = ((gg - mean) / jnp.sqrt(var + eps)).reshape(bg, cg, h, w)
    x1 = x1 * params["gamma"][None, :, None, None] + params["beta"][None, :, None, None]

    x2 = jax.lax.conv_general_dilated(
        gx, params["w3"], window_strides=(1, 1), padding="SAME",
        dimension_numbers=("NCHW", "OIHW", "NCHW"))
    x2 = x2 + params["b3"][None, :, None, None]

    x11 = jax.nn.softmax(jnp.mean(x1, axis=(2, 3)).reshape(bg, 1, cg), axis=-1)
    x21 = jax.nn.softmax(jnp.mean(x2, axis=(2, 3)).reshape(bg, 1, cg), axis=-1)
    x12 = x2.reshape(bg, cg, h * w)
    x22 = x1.reshape(bg, cg, h * w)
    wts = (jnp.matmul(x11, x12) + jnp.matmul(x21, x22)).reshape(bg, 1, h, w)
    return (gx * jax.nn.sigmoid(wts)).reshape(b, c, h, w)


# ----------------------------------------------------------------------------
if __name__ == "__main__":
    def run_case(b, c, h, w, factor, mxu_dtype, tol):
        cg = c // factor
        key = jax.random.PRNGKey(0)
        k1, k2, k3, k4, k5, k6, kx = jax.random.split(key, 7)
        params = {
            "w1":    jax.random.normal(k1, (cg, cg), jnp.float32) * 0.3,
            "b1":    jax.random.normal(k2, (cg,), jnp.float32) * 0.1,
            "w3":    jax.random.normal(k3, (cg, cg, 3, 3), jnp.float32) * 0.2,
            "b3":    jax.random.normal(k4, (cg,), jnp.float32) * 0.1,
            "gamma": 1.0 + 0.1 * jax.random.normal(k5, (cg,), jnp.float32),
            "beta":  0.1 * jax.random.normal(k6, (cg,), jnp.float32),
        }
        x = jax.random.normal(kx, (b, c, h, w), jnp.float32)

        out = ema_pallas(x, params, factor, mxu_dtype=mxu_dtype)
        jax.block_until_ready(out)

        ref = ema_reference(x, params, factor)
        assert out.shape == (b, c, h, w)
        max_err = float(jnp.max(jnp.abs(out - ref)))
        assert max_err < tol, f"max abs error too large: {max_err}"

    # f32 MXU operands: strict numerical parity. hw=256 is lane-aligned; all 8
    # slices stack into one (32, 256) step.
    run_case(2, 16, 16, 16, 4, jnp.float32, 1e-3)
    # exercises lane padding (10*10 -> 128) and slice padding (bg=2 -> n=4).
    run_case(1, 12, 10, 10, 2, jnp.float32, 1e-3)
    # bf16 MXU operands (v5e/v6e/v7x fast path): relaxed tolerance.
    run_case(2, 16, 16, 16, 4, jnp.bfloat16, 1e-1)

    print("KERNEL_OK")
</pallas_src>

<mosaic_0001>
module attributes {stable_mosaic.version = 11 : i64} {
  func.func @ema_kernel(%arg0: i32, %arg1: memref<32x256xf32, #tpu.memory_space<vmem>>, %arg2: memref<32x32xf32, #tpu.memory_space<vmem>>, %arg3: memref<32x1xf32, #tpu.memory_space<vmem>>, %arg4: memref<32x288xf32, #tpu.memory_space<vmem>>, %arg5: memref<32x1xf32, #tpu.memory_space<vmem>>, %arg6: memref<32x1xf32, #tpu.memory_space<vmem>>, %arg7: memref<32x1xf32, #tpu.memory_space<vmem>>, %arg8: memref<32x32xf32, #tpu.memory_space<vmem>>, %arg9: memref<32x32xf32, #tpu.memory_space<vmem>>, %arg10: memref<256x32xf32, #tpu.memory_space<vmem>>, %arg11: memref<32x256xf32, #tpu.memory_space<vmem>>, %arg12: memref<32x256xf32, #tpu.memory_space<vmem>>, %arg13: memref<9x256xf32, #tpu.memory_space<vmem>>, %arg14: memref<256x1xf32, #tpu.memory_space<vmem>>, %arg15: memref<32x256xf32, #tpu.memory_space<vmem>>) attributes {dimension_semantics = [#tpu.dimension_semantics<parallel>], iteration_bounds = array<i64: 1>, scalar_prefetch = 0 : i64, scratch_operands = 0 : i64, tpu.core_type = #tpu.core_type<tc>, window_params = [{transform_indices = @transform_0, window_bounds = array<i64: 32, 256>}, {pipeline_mode = #tpu.pipeline_mode<synchronous>, transform_indices = @transform_1, window_bounds = array<i64: 32, 32>}, {pipeline_mode = #tpu.pipeline_mode<synchronous>, transform_indices = @transform_2, window_bounds = array<i64: 32, 1>}, {pipeline_mode = #tpu.pipeline_mode<synchronous>, transform_indices = @transform_3, window_bounds = array<i64: 32, 288>}, {pipeline_mode = #tpu.pipeline_mode<synchronous>, transform_indices = @transform_4, window_bounds = array<i64: 32, 1>}, {pipeline_mode = #tpu.pipeline_mode<synchronous>, transform_indices = @transform_5, window_bounds = array<i64: 32, 1>}, {pipeline_mode = #tpu.pipeline_mode<synchronous>, transform_indices = @transform_6, window_bounds = array<i64: 32, 1>}, {pipeline_mode = #tpu.pipeline_mode<synchronous>, transform_indices = @transform_7, window_bounds = array<i64: 32, 32>}, {pipeline_mode = #tpu.pipeline_mode<synchronous>, transform_indices = @transform_8, window_bounds = array<i64: 32, 32>}, {pipeline_mode = #tpu.pipeline_mode<synchronous>, transform_indices = @transform_9, window_bounds = array<i64: 256, 32>}, {pipeline_mode = #tpu.pipeline_mode<synchronous>, transform_indices = @transform_10, window_bounds = array<i64: 32, 256>}, {pipeline_mode = #tpu.pipeline_mode<synchronous>, transform_indices = @transform_11, window_bounds = array<i64: 32, 256>}, {pipeline_mode = #tpu.pipeline_mode<synchronous>, transform_indices = @transform_12, window_bounds = array<i64: 9, 256>}, {pipeline_mode = #tpu.pipeline_mode<synchronous>, transform_indices = @transform_13, window_bounds = array<i64: 256, 1>}, {transform_indices = @transform_14, window_bounds = array<i64: 32, 256>}]} {
    %c0 = arith.constant 0 : index
    %c0_0 = arith.constant 0 : index
    %0 = vector.load %arg1[%c0, %c0_0] : memref<32x256xf32, #tpu.memory_space<vmem>>, vector<32x256xf32>
    %c0_1 = arith.constant 0 : index
    %c0_2 = arith.constant 0 : index
    %1 = vector.load %arg14[%c0_1, %c0_2] : memref<256x1xf32, #tpu.memory_space<vmem>>, vector<256x1xf32>
    %c0_3 = arith.constant 0 : index
    %c0_4 = arith.constant 0 : index
    %2 = vector.load %arg10[%c0_3, %c0_4] : memref<256x32xf32, #tpu.memory_space<vmem>>, vector<256x32xf32>
    %cst = arith.constant dense<0.000000e+00> : vector<32x32xf32>
    %3 = tpu.matmul %0, %2, %cst {dimension_numbers = #tpu.dot_dimension_numbers<[1], [0], [0], [1], [0, 0, 1, 1], [], []>} : vector<32x256xf32>, vector<256x32xf32>, vector<32x32xf32> -> vector<32x32xf32>
    %c0_5 = arith.constant 0 : index
    %c0_6 = arith.constant 0 : index
    %4 = vector.load %arg2[%c0_5, %c0_6] : memref<32x32xf32, #tpu.memory_space<vmem>>, vector<32x32xf32>
    %cst_7 = arith.constant dense<0.000000e+00> : vector<32x32xf32>
    %5 = tpu.matmul %4, %3, %cst_7 {dimension_numbers = #tpu.dot_dimension_numbers<[1], [0], [0], [1], [0, 0, 1, 1], [], []>} : vector<32x32xf32>, vector<32x32xf32>, vector<32x32xf32> -> vector<32x32xf32>
    %c0_8 = arith.constant 0 : index
    %c0_9 = arith.constant 0 : index
    %6 = vector.load %arg3[%c0_8, %c0_9] : memref<32x1xf32, #tpu.memory_space<vmem>>, vector<32x1xf32>
    %7 = vector.broadcast %6 : vector<32x1xf32> to vector<32x32xf32>
    %8 = arith.addf %5, %7 : vector<32x32xf32>
    %9 = arith.negf %8 : vector<32x32xf32>
    %10 = math.exp %9 : vector<32x32xf32>
    %cst_10 = arith.constant 1.000000e+00 : f32
    %11 = vector.broadcast %cst_10 : f32 to vector<32x32xf32>
    %12 = arith.addf %11, %10 : vector<32x32xf32>
    %13 = arith.divf %11, %12 : vector<32x32xf32>
    %c0_11 = arith.constant 0 : index
    %c0_12 = arith.constant 0 : index
    %14 = vector.load %arg11[%c0_11, %c0_12] : memref<32x256xf32, #tpu.memory_space<vmem>>, vector<32x256xf32>
    %cst_13 = arith.constant dense<0.000000e+00> : vector<32x256xf32>
    %15 = tpu.matmul %13, %14, %cst_13 {dimension_numbers = #tpu.dot_dimension_numbers<[1], [0], [0], [1], [0, 0, 1, 1], [], []>} : vector<32x32xf32>, vector<32x256xf32>, vector<32x256xf32> -> vector<32x256xf32>
    %c0_14 = arith.constant 0 : index
    %c0_15 = arith.constant 0 : index
    %16 = vector.load %arg12[%c0_14, %c0_15] : memref<32x256xf32, #tpu.memory_space<vmem>>, vector<32x256xf32>
    %cst_16 = arith.constant dense<0.000000e+00> : vector<32x256xf32>
    %17 = tpu.matmul %13, %16, %cst_16 {dimension_numbers = #tpu.dot_dimension_numbers<[1], [0], [0], [1], [0, 0, 1, 1], [], []>} : vector<32x32xf32>, vector<32x256xf32>, vector<32x256xf32> -> vector<32x256xf32>
    %18 = arith.mulf %15, %17 : vector<32x256xf32>
    %19 = arith.mulf %0, %18 : vector<32x256xf32>
    %c0_17 = arith.constant 0 : index
    %c0_18 = arith.constant 0 : index
    %20 = vector.load %arg8[%c0_17, %c0_18] : memref<32x32xf32, #tpu.memory_space<vmem>>, vector<32x32xf32>
    %cst_19 = arith.constant dense<0.000000e+00> : vector<32x1xf32>
    %21 = tpu.matmul %19, %1, %cst_19 {dimension_numbers = #tpu.dot_dimension_numbers<[1], [0], [0], [1], [0, 0, 1, 1], [], []>} : vector<32x256xf32>, vector<256x1xf32>, vector<32x1xf32> -> vector<32x1xf32>
    %cst_20 = arith.constant dense<0.000000e+00> : vector<32x1xf32>
    %22 = tpu.matmul %20, %21, %cst_20 {dimension_numbers = #tpu.dot_dimension_numbers<[1], [0], [0], [1], [0, 0, 1, 1], [], []>} : vector<32x32xf32>, vector<32x1xf32>, vector<32x1xf32> -> vector<32x1xf32>
    %23 = vector.broadcast %22 : vector<32x1xf32> to vector<32x256xf32>
    %24 = arith.subf %19, %23 : vector<32x256xf32>
    %25 = arith.mulf %24, %24 : vector<32x256xf32>
    %cst_21 = arith.constant dense<0.000000e+00> : vector<32x1xf32>
    %26 = tpu.matmul %25, %1, %cst_21 {dimension_numbers = #tpu.dot_dimension_numbers<[1], [0], [0], [1], [0, 0, 1, 1], [], []>} : vector<32x256xf32>, vector<256x1xf32>, vector<32x1xf32> -> vector<32x1xf32>
    %cst_22 = arith.constant dense<0.000000e+00> : vector<32x1xf32>
    %27 = tpu.matmul %20, %26, %cst_22 {dimension_numbers = #tpu.dot_dimension_numbers<[1], [0], [0], [1], [0, 0, 1, 1], [], []>} : vector<32x32xf32>, vector<32x1xf32>, vector<32x1xf32> -> vector<32x1xf32>
    %cst_23 = arith.constant 9.99999974E-6 : f32
    %28 = vector.broadcast %cst_23 : f32 to vector<32x1xf32>
    %29 = arith.addf %27, %28 : vector<32x1xf32>
    %30 = math.rsqrt %29 : vector<32x1xf32>
    %c0_24 = arith.constant 0 : index
    %c0_25 = arith.constant 0 : index
    %31 = vector.load %arg6[%c0_24, %c0_25] : memref<32x1xf32, #tpu.memory_space<vmem>>, vector<32x1xf32>
    %32 = arith.mulf %30, %31 : vector<32x1xf32>
    %33 = vector.broadcast %32 : vector<32x1xf32> to vector<32x256xf32>
    %34 = arith.mulf %24, %33 : vector<32x256xf32>
    %c0_26 = arith.constant 0 : index
    %c0_27 = arith.constant 0 : index
    %35 = vector.load %arg7[%c0_26, %c0_27] : memref<32x1xf32, #tpu.memory_space<vmem>>, vector<32x1xf32>
    %36 = vector.broadcast %35 : vector<32x1xf32> to vector<32x256xf32>
    %37 = arith.addf %34, %36 : vector<32x256xf32>
    %c17_i32 = arith.constant 17 : i32
    %38 = tpu.dynamic_rotate %0 by %c17_i32 dim 1 : vector<32x256xf32>, i32 -> vector<32x256xf32>
    %c0_28 = arith.constant 0 : index
    %c0_29 = arith.constant 0 : index
    %39 = vector.load %arg13[%c0_28, %c0_29] : memref<9x256xf32, #tpu.memory_space<vmem>>, vector<1x256xf32>
    %40 = vector.broadcast %39 : vector<1x256xf32> to vector<32x256xf32>
    %41 = arith.mulf %38, %40 : vector<32x256xf32>
    %c16_i32 = arith.constant 16 : i32
    %42 = tpu.dynamic_rotate %0 by %c16_i32 dim 1 : vector<32x256xf32>, i32 -> vector<32x256xf32>
    %c1 = arith.constant 1 : index
    %c0_30 = arith.constant 0 : index
    %43 = vector.load %arg13[%c1, %c0_30] : memref<9x256xf32, #tpu.memory_space<vmem>>, vector<1x256xf32>
    %44 = vector.broadcast %43 : vector<1x256xf32> to vector<32x256xf32>
    %45 = arith.mulf %42, %44 : vector<32x256xf32>
    %c15_i32 = arith.constant 15 : i32
    %46 = tpu.dynamic_rotate %0 by %c15_i32 dim 1 : vector<32x256xf32>, i32 -> vector<32x256xf32>
    %c2 = arith.constant 2 : index
    %c0_31 = arith.constant 0 : index
    %47 = vector.load %arg13[%c2, %c0_31] : memref<9x256xf32, #tpu.memory_space<vmem>>, vector<1x256xf32>
    %48 = vector.broadcast %47 : vector<1x256xf32> to vector<32x256xf32>
    %49 = arith.mulf %46, %48 : vector<32x256xf32>
    %c1_i32 = arith.constant 1 : i32
    %50 = tpu.dynamic_rotate %0 by %c1_i32 dim 1 : vector<32x256xf32>, i32 -> vector<32x256xf32>
    %c3 = arith.constant 3 : index
    %c0_32 = arith.constant 0 : index
    %51 = vector.load %arg13[%c3, %c0_32] : memref<9x256xf32, #tpu.memory_space<vmem>>, vector<1x256xf32>
    %52 = vector.broadcast %51 : vector<1x256xf32> to vector<32x256xf32>
    %53 = arith.mulf %50, %52 : vector<32x256xf32>
    %c4 = arith.constant 4 : index
    %c0_33 = arith.constant 0 : index
    %54 = vector.load %arg13[%c4, %c0_33] : memref<9x256xf32, #tpu.memory_space<vmem>>, vector<1x256xf32>
    %55 = vector.broadcast %54 : vector<1x256xf32> to vector<32x256xf32>
    %56 = arith.mulf %0, %55 : vector<32x256xf32>
    %c255_i32 = arith.constant 255 : i32
    %57 = tpu.dynamic_rotate %0 by %c255_i32 dim 1 : vector<32x256xf32>, i32 -> vector<32x256xf32>
    %c5 = arith.constant 5 : index
    %c0_34 = arith.constant 0 : index
    %58 = vector.load %arg13[%c5, %c0_34] : memref<9x256xf32, #tpu.memory_space<vmem>>, vector<1x256xf32>
    %59 = vector.broadcast %58 : vector<1x256xf32> to vector<32x256xf32>
    %60 = arith.mulf %57, %59 : vector<32x256xf32>
    %c241_i32 = arith.constant 241 : i32
    %61 = tpu.dynamic_rotate %0 by %c241_i32 dim 1 : vector<32x256xf32>, i32 -> vector<32x256xf32>
    %c6 = arith.constant 6 : index
    %c0_35 = arith.constant 0 : index
    %62 = vector.load %arg13[%c6, %c0_35] : memref<9x256xf32, #tpu.memory_space<vmem>>, vector<1x256xf32>
    %63 = vector.broadcast %62 : vector<1x256xf32> to vector<32x256xf32>
    %64 = arith.mulf %61, %63 : vector<32x256xf32>
    %c240_i32 = arith.constant 240 : i32
    %65 = tpu.dynamic_rotate %0 by %c240_i32 dim 1 : vector<32x256xf32>, i32 -> vector<32x256xf32>
    %c7 = arith.constant 7 : index
    %c0_36 = arith.constant 0 : index
    %66 = vector.load %arg13[%c7, %c0_36] : memref<9x256xf32, #tpu.memory_space<vmem>>, vector<1x256xf32>
    %67 = vector.broadcast %66 : vector<1x256xf32> to vector<32x256xf32>
    %68 = arith.mulf %65, %67 : vector<32x256xf32>
    %c239_i32 = arith.constant 239 : i32
    %69 = tpu.dynamic_rotate %0 by %c239_i32 dim 1 : vector<32x256xf32>, i32 -> vector<32x256xf32>
    %c8 = arith.constant 8 : index
    %c0_37 = arith.constant 0 : index
    %70 = vector.load %arg13[%c8, %c0_37] : memref<9x256xf32, #tpu.memory_space<vmem>>, vector<1x256xf32>
    %71 = vector.broadcast %70 : vector<1x256xf32> to vector<32x256xf32>
    %72 = arith.mulf %69, %71 : vector<32x256xf32>
    %73 = tpu.concatenate %41, %45, %49, %53, %56, %60, %64, %68, %72 in 0 : vector<32x256xf32>, vector<32x256xf32>, vector<32x256xf32>, vector<32x256xf32>, vector<32x256xf32>, vector<32x256xf32>, vector<32x256xf32>, vector<32x256xf32>, vector<32x256xf32> -> vector<288x256xf32>
    %c0_38 = arith.constant 0 : index
    %c0_39 = arith.constant 0 : index
    %74 = vector.load %arg4[%c0_38, %c0_39] : memref<32x288xf32, #tpu.memory_space<vmem>>, vector<32x288xf32>
    %cst_40 = arith.constant dense<0.000000e+00> : vector<32x256xf32>
    %75 = tpu.matmul %74, %73, %cst_40 {dimension_numbers = #tpu.dot_dimension_numbers<[1], [0], [0], [1], [0, 0, 1, 1], [], []>} : vector<32x288xf32>, vector<288x256xf32>, vector<32x256xf32> -> vector<32x256xf32>
    %c0_41 = arith.constant 0 : index
    %c0_42 = arith.constant 0 : index
    %76 = vector.load %arg5[%c0_41, %c0_42] : memref<32x1xf32, #tpu.memory_space<vmem>>, vector<32x1xf32>
    %77 = vector.broadcast %76 : vector<32x1xf32> to vector<32x256xf32>
    %78 = arith.addf %75, %77 : vector<32x256xf32>
    %cst_43 = arith.constant dense<0.000000e+00> : vector<32x1xf32>
    %79 = tpu.matmul %37, %1, %cst_43 {dimension_numbers = #tpu.dot_dimension_numbers<[1], [0], [0], [1], [0, 0, 1, 1], [], []>} : vector<32x256xf32>, vector<256x1xf32>, vector<32x1xf32> -> vector<32x1xf32>
    %cst_44 = arith.constant 3.906250e-03 : f32
    %80 = vector.broadcast %cst_44 : f32 to vector<32x1xf32>
    %81 = arith.mulf %79, %80 : vector<32x1xf32>
    %cst_45 = arith.constant dense<0.000000e+00> : vector<32x1xf32>
    %82 = tpu.matmul %78, %1, %cst_45 {dimension_numbers = #tpu.dot_dimension_numbers<[1], [0], [0], [1], [0, 0, 1, 1], [], []>} : vector<32x256xf32>, vector<256x1xf32>, vector<32x1xf32> -> vector<32x1xf32>
    %cst_46 = arith.constant 3.906250e-03 : f32
    %83 = vector.broadcast %cst_46 : f32 to vector<32x1xf32>
    %84 = arith.mulf %82, %83 : vector<32x1xf32>
    %c0_47 = arith.constant 0 : index
    %c0_48 = arith.constant 0 : index
    %85 = vector.load %arg9[%c0_47, %c0_48] : memref<32x32xf32, #tpu.memory_space<vmem>>, vector<32x32xf32>
    %cst_49 = arith.constant dense<0xFF800000> : vector<1xf32>
    %86 = vector.multi_reduction <maximumf>, %81, %cst_49 [0] : vector<32x1xf32> to vector<1xf32>
    %87 = vector.shape_cast %86 : vector<1xf32> to vector<1x1xf32>
    %88 = vector.broadcast %87 : vector<1x1xf32> to vector<32x1xf32>
    %89 = arith.subf %81, %88 : vector<32x1xf32>
    %90 = math.exp %89 : vector<32x1xf32>
    %cst_50 = arith.constant dense<0xFF800000> : vector<1xf32>
    %91 = vector.multi_reduction <maximumf>, %84, %cst_50 [0] : vector<32x1xf32> to vector<1xf32>
    %92 = vector.shape_cast %91 : vector<1xf32> to vector<1x1xf32>
    %93 = vector.broadcast %92 : vector<1x1xf32> to vector<32x1xf32>
    %94 = arith.subf %84, %93 : vector<32x1xf32>
    %95 = math.exp %94 : vector<32x1xf32>
    %cst_51 = arith.constant dense<0.000000e+00> : vector<32x1xf32>
    %96 = tpu.matmul %85, %90, %cst_51 {dimension_numbers = #tpu.dot_dimension_numbers<[1], [0], [0], [1], [0, 0, 1, 1], [], []>} : vector<32x32xf32>, vector<32x1xf32>, vector<32x1xf32> -> vector<32x1xf32>
    %97 = arith.divf %90, %96 : vector<32x1xf32>
    %cst_52 = arith.constant dense<0.000000e+00> : vector<32x1xf32>
    %98 = tpu.matmul %85, %95, %cst_52 {dimension_numbers = #tpu.dot_dimension_numbers<[1], [0], [0], [1], [0, 0, 1, 1], [], []>} : vector<32x32xf32>, vector<32x1xf32>, vector<32x1xf32> -> vector<32x1xf32>
    %99 = arith.divf %95, %98 : vector<32x1xf32>
    %100 = vector.broadcast %97 : vector<32x1xf32> to vector<32x256xf32>
    %101 = arith.mulf %100, %78 : vector<32x256xf32>
    %102 = vector.broadcast %99 : vector<32x1xf32> to vector<32x256xf32>
    %103 = arith.mulf %102, %37 : vector<32x256xf32>
    %104 = arith.addf %101, %103 : vector<32x256xf32>
    %cst_53 = arith.constant dense<0.000000e+00> : vector<32x256xf32>
    %105 = tpu.matmul %85, %104, %cst_53 {dimension_numbers = #tpu.dot_dimension_numbers<[1], [0], [0], [1], [0, 0, 1, 1], [], []>} : vector<32x32xf32>, vector<32x256xf32>, vector<32x256xf32> -> vector<32x256xf32>
    %106 = arith.negf %105 : vector<32x256xf32>
    %107 = math.exp %106 : vector<32x256xf32>
    %cst_54 = arith.constant 1.000000e+00 : f32
    %108 = vector.broadcast %cst_54 : f32 to vector<32x256xf32>
    %109 = arith.addf %108, %107 : vector<32x256xf32>
    %110 = arith.divf %108, %109 : vector<32x256xf32>
    %111 = arith.mulf %0, %110 : vector<32x256xf32>
    %c0_55 = arith.constant 0 : index
    %c0_56 = arith.constant 0 : index
    %112 = vector.load %arg15[%c0_55, %c0_56] : memref<32x256xf32, #tpu.memory_space<vmem>>, vector<32x256xf32>
    tpu.vector_store %arg15[%c0_55, %c0_56], %111 {strides = array<i32>} : memref<32x256xf32, #tpu.memory_space<vmem>>, vector<32x256xf32>,
    return
  }
  func.func @transform_0(%arg0: i32) -> (i32, i32) {
    %c0_i32 = arith.constant 0 : i32
    %c0_i32_0 = arith.constant 0 : i32
    return %arg0, %c0_i32 : i32, i32
  }
  func.func @transform_1(%arg0: i32) -> (i32, i32) {
    %c0_i32 = arith.constant 0 : i32
    %c0_i32_0 = arith.constant 0 : i32
    %c0_i32_1 = arith.constant 0 : i32
    return %c0_i32, %c0_i32_0 : i32, i32
  }
  func.func @transform_2(%arg0: i32) -> (i32, i32) {
    %c0_i32 = arith.constant 0 : i32
    %c0_i32_0 = arith.constant 0 : i32
    %c0_i32_1 = arith.constant 0 : i32
    return %c0_i32, %c0_i32_0 : i32, i32
  }
  func.func @transform_3(%arg0: i32) -> (i32, i32) {
    %c0_i32 = arith.constant 0 : i32
    %c0_i32_0 = arith.constant 0 : i32
    %c0_i32_1 = arith.constant 0 : i32
    return %c0_i32, %c0_i32_0 : i32, i32
  }
  func.func @transform_4(%arg0: i32) -> (i32, i32) {
    %c0_i32 = arith.constant 0 : i32
    %c0_i32_0 = arith.constant 0 : i32
    %c0_i32_1 = arith.constant 0 : i32
    return %c0_i32, %c0_i32_0 : i32, i32
  }
  func.func @transform_5(%arg0: i32) -> (i32, i32) {
    %c0_i32 = arith.constant 0 : i32
    %c0_i32_0 = arith.constant 0 : i32
    %c0_i32_1 = arith.constant 0 : i32
    return %c0_i32, %c0_i32_0 : i32, i32
  }
  func.func @transform_6(%arg0: i32) -> (i32, i32) {
    %c0_i32 = arith.constant 0 : i32
    %c0_i32_0 = arith.constant 0 : i32
    %c0_i32_1 = arith.constant 0 : i32
    return %c0_i32, %c0_i32_0 : i32, i32
  }
  func.func @transform_7(%arg0: i32) -> (i32, i32) {
    %c0_i32 = arith.constant 0 : i32
    %c0_i32_0 = arith.constant 0 : i32
    %c0_i32_1 = arith.constant 0 : i32
    return %c0_i32, %c0_i32_0 : i32, i32
  }
  func.func @transform_8(%arg0: i32) -> (i32, i32) {
    %c0_i32 = arith.constant 0 : i32
    %c0_i32_0 = arith.constant 0 : i32
    %c0_i32_1 = arith.constant 0 : i32
    return %c0_i32, %c0_i32_0 : i32, i32
  }
  func.func @transform_9(%arg0: i32) -> (i32, i32) {
    %c0_i32 = arith.constant 0 : i32
    %c0_i32_0 = arith.constant 0 : i32
    %c0_i32_1 = arith.constant 0 : i32
    return %c0_i32, %c0_i32_0 : i32, i32
  }
  func.func @transform_10(%arg0: i32) -> (i32, i32) {
    %c0_i32 = arith.constant 0 : i32
    %c0_i32_0 = arith.constant 0 : i32
    %c0_i32_1 = arith.constant 0 : i32
    return %c0_i32, %c0_i32_0 : i32, i32
  }
  func.func @transform_11(%arg0: i32) -> (i32, i32) {
    %c0_i32 = arith.constant 0 : i32
    %c0_i32_0 = arith.constant 0 : i32
    %c0_i32_1 = arith.constant 0 : i32
    return %c0_i32, %c0_i32_0 : i32, i32
  }
  func.func @transform_12(%arg0: i32) -> (i32, i32) {
    %c0_i32 = arith.constant 0 : i32
    %c0_i32_0 = arith.constant 0 : i32
    %c0_i32_1 = arith.constant 0 : i32
    return %c0_i32, %c0_i32_0 : i32, i32
  }
  func.func @transform_13(%arg0: i32) -> (i32, i32) {
    %c0_i32 = arith.constant 0 : i32
    %c0_i32_0 = arith.constant 0 : i32
    %c0_i32_1 = arith.constant 0 : i32
    return %c0_i32, %c0_i32_0 : i32, i32
  }
  func.func @transform_14(%arg0: i32) -> (i32, i32) {
    %c0_i32 = arith.constant 0 : i32
    %c0_i32_0 = arith.constant 0 : i32
    return %arg0, %c0_i32 : i32, i32
  }
}

</mosaic_0001>

<llo_original>
// kernel: tpu_custom_call.1
$region0: #{tpu_custom_call.1}
  #allocation0 [shape = 'u32[]', space=smem, size = 0x4, offset = 0x4, fixed_abs, tag = 'smem constant byte address 0x4 - core index']
  #allocation1 [shape = 'u32[144,128]{1,0:T(1,128)}', space=vmem, size = 0x12000, scoped, tag = 'internal scratch']
  %s0 = inlined_call_operand.vmem [shape: f32[32,256], index: 0, kind: input, shape index: {}]
  %s1 = inlined_call_operand.vmem [shape: f32[32,32], index: 1, kind: input, shape index: {}]
  %s2 = inlined_call_operand.vmem [shape: f32[32,1], index: 2, kind: input, shape index: {}]
  %s3 = inlined_call_operand.vmem [shape: f32[32,288], index: 3, kind: input, shape index: {}]
  %s4 = inlined_call_operand.vmem [shape: f32[32,1], index: 4, kind: input, shape index: {}]
  %s5 = inlined_call_operand.vmem [shape: f32[32,1], index: 5, kind: input, shape index: {}]
  %s6 = inlined_call_operand.vmem [shape: f32[32,1], index: 6, kind: input, shape index: {}]
  %s7 = inlined_call_operand.vmem [shape: f32[32,32], index: 7, kind: input, shape index: {}]
  %s8 = inlined_call_operand.vmem [shape: f32[32,32], index: 8, kind: input, shape index: {}]
  %s9 = inlined_call_operand.vmem [shape: f32[256,32], index: 9, kind: input, shape index: {}]
  %s10 = inlined_call_operand.vmem [shape: f32[32,256], index: 10, kind: input, shape index: {}]
  %s11 = inlined_call_operand.vmem [shape: f32[32,256], index: 11, kind: input, shape index: {}]
  %s12 = inlined_call_operand.vmem [shape: f32[9,256], index: 12, kind: input, shape index: {}]
  %s13 = inlined_call_operand.vmem [shape: f32[256,1], index: 13, kind: input, shape index: {}]
  %s14 = inlined_call_operand.hbm [shape: f32[32,256], index: 14, kind: output, shape index: {}]
  %s15 = sld [smem:[#allocation0]]
  $region66: #{tpu_custom_call.1} parent=0
    _
  %s17 = ssub.s32 1, %s15
  %s18 = scalar_select 0, %s17, %s15
  $region1: #{tpu_custom_call.1} parent=0
    #allocation2 [shape = 'u8[32768]{0}', space=vmem, size = 0x8000, scoped, tag = 'output window, operand 0, single buffered']
    #allocation3 [shape = 's32[1]{0}', space=sflag, size = 0x4, scoped, tag = 'scoped memory for tpu_custom_call.1']
    %19 = vsyncpa [#allocation3], 0
    // Predicated region
    $region2: #{tpu_custom_call.1} parent=1 // pred_check
      _
    $region3: #{tpu_custom_call.1} parent=1 // pred_check_branch
      %21 = sbr.rel (0) target = $region5
    $region4: #{tpu_custom_call.1} parent=1 // pred_region
      _
    $region5: #{tpu_custom_call.1} parent=1 // pred_fallthru
      _
    // Predicated region
    $region6: #{tpu_custom_call.1} parent=1 // pred_check
      _
    $region7: #{tpu_custom_call.1} parent=1 // pred_check_branch
      %23 = sbr.rel (0) target = $region9
    $region8: #{tpu_custom_call.1} parent=1 // pred_region
      _
    $region9: #{tpu_custom_call.1} parent=1 // pred_fallthru
      _
    // Predicated region
    $region10: #{tpu_custom_call.1} parent=1 // pred_check
      _
    $region11: #{tpu_custom_call.1} parent=1 // pred_check_branch
      %25 = sbr.rel (0) target = $region13
    $region12: #{tpu_custom_call.1} parent=1 // pred_region
      _
    $region13: #{tpu_custom_call.1} parent=1 // pred_fallthru
      _
    // Predicated region
    $region14: #{tpu_custom_call.1} parent=1 // pred_check
      _
    $region15: #{tpu_custom_call.1} parent=1 // pred_check_branch
      %27 = sbr.rel (0) target = $region17
    $region16: #{tpu_custom_call.1} parent=1 // pred_region
      _
    $region17: #{tpu_custom_call.1} parent=1 // pred_fallthru
      _
    // Predicated region
    $region18: #{tpu_custom_call.1} parent=1 // pred_check
      _
    $region19: #{tpu_custom_call.1} parent=1 // pred_check_branch
      %29 = sbr.rel (0) target = $region21
    $region20: #{tpu_custom_call.1} parent=1 // pred_region
      _
    $region21: #{tpu_custom_call.1} parent=1 // pred_fallthru
      _
    // Predicated region
    $region22: #{tpu_custom_call.1} parent=1 // pred_check
      _
    $region23: #{tpu_custom_call.1} parent=1 // pred_check_branch
      %31 = sbr.rel (0) target = $region25
    $region24: #{tpu_custom_call.1} parent=1 // pred_region
      _
    $region25: #{tpu_custom_call.1} parent=1 // pred_fallthru
      _
    // Predicated region
    $region26: #{tpu_custom_call.1} parent=1 // pred_check
      _
    $region27: #{tpu_custom_call.1} parent=1 // pred_check_branch
      %33 = sbr.rel (0) target = $region29
    $region28: #{tpu_custom_call.1} parent=1 // pred_region
      _
    $region29: #{tpu_custom_call.1} parent=1 // pred_fallthru
      _
    // Predicated region
    $region30: #{tpu_custom_call.1} parent=1 // pred_check
      _
    $region31: #{tpu_custom_call.1} parent=1 // pred_check_branch
      %35 = sbr.rel (0) target = $region33
    $region32: #{tpu_custom_call.1} parent=1 // pred_region
      _
    $region33: #{tpu_custom_call.1} parent=1 // pred_fallthru
      _
    // Predicated region
    $region34: #{tpu_custom_call.1} parent=1 // pred_check
      _
    $region35: #{tpu_custom_call.1} parent=1 // pred_check_branch
      %37 = sbr.rel (0) target = $region37
    $region36: #{tpu_custom_call.1} parent=1 // pred_region
      _
    $region37: #{tpu_custom_call.1} parent=1 // pred_fallthru
      _
    // Predicated region
    $region38: #{tpu_custom_call.1} parent=1 // pred_check
      _
    $region39: #{tpu_custom_call.1} parent=1 // pred_check_branch
      %39 = sbr.rel (0) target = $region41
    $region40: #{tpu_custom_call.1} parent=1 // pred_region
      _
    $region41: #{tpu_custom_call.1} parent=1 // pred_fallthru
      _
    // Predicated region
    $region42: #{tpu_custom_call.1} parent=1 // pred_check
      _
    $region43: #{tpu_custom_call.1} parent=1 // pred_check_branch
      %41 = sbr.rel (0) target = $region45
    $region44: #{tpu_custom_call.1} parent=1 // pred_region
      _
    $region45: #{tpu_custom_call.1} parent=1 // pred_fallthru
      _
    // Predicated region
    $region46: #{tpu_custom_call.1} parent=1 // pred_check
      _
    $region47: #{tpu_custom_call.1} parent=1 // pred_check_branch
      %43 = sbr.rel (0) target = $region49
    $region48: #{tpu_custom_call.1} parent=1 // pred_region
      _
    $region49: #{tpu_custom_call.1} parent=1 // pred_fallthru
      _
    // Predicated region
    $region50: #{tpu_custom_call.1} parent=1 // pred_check
      _
    $region51: #{tpu_custom_call.1} parent=1 // pred_check_branch
      %45 = sbr.rel (0) target = $region53
    $region52: #{tpu_custom_call.1} parent=1 // pred_region
      _
    $region53: #{tpu_custom_call.1} parent=1 // pred_fallthru
      _
    // Predicated region
    $region54: #{tpu_custom_call.1} parent=1 // pred_check
      _
    $region55: #{tpu_custom_call.1} parent=1 // pred_check_branch
      %47 = sbr.rel (0) target = $region57
    $region56: #{tpu_custom_call.1} parent=1 // pred_region
      _
    $region57: #{tpu_custom_call.1} parent=1 // pred_fallthru
      _
    %v48 = vld [vmem:[%s0] sm:$0xff]
    %v49 = vld [vmem:[%s0 + $0x8] sm:$0xff]
    %v50 = vld [vmem:[%s0 + $0x10] sm:$0xff]
    %v51 = vld [vmem:[%s0 + $0x18] sm:$0xff]
    %v52 = vld [vmem:[%s0 + $0x20] sm:$0xff]
    %v53 = vld [vmem:[%s0 + $0x28] sm:$0xff]
    %v54 = vld [vmem:[%s0 + $0x30] sm:$0xff]
    %v55 = vld [vmem:[%s0 + $0x38] sm:$0xff]
    %v56 = vld [vmem:[%s13] sm:$0xff]
    %v57 = vld [vmem:[%s13 + $0x8] sm:$0xff]
    %v58 = vld [vmem:[%s13 + $0x10] sm:$0xff]
    %v59 = vld [vmem:[%s13 + $0x18] sm:$0xff]
    %v60 = vld [vmem:[%s13 + $0x20] sm:$0xff]
    %v61 = vld [vmem:[%s13 + $0x28] sm:$0xff]
    %v62 = vld [vmem:[%s13 + $0x30] sm:$0xff]
    %v63 = vld [vmem:[%s13 + $0x38] sm:$0xff]
    %v64 = vld [vmem:[%s13 + $0x40] sm:$0xff]
    %v65 = vld [vmem:[%s13 + $0x48] sm:$0xff]
    %v66 = vld [vmem:[%s13 + $0x50] sm:$0xff]
    %v67 = vld [vmem:[%s13 + $0x58] sm:$0xff]
    %v68 = vld [vmem:[%s13 + $0x60] sm:$0xff]
    %v69 = vld [vmem:[%s13 + $0x68] sm:$0xff]
    %v70 = vld [vmem:[%s13 + $0x70] sm:$0xff]
    %v71 = vld [vmem:[%s13 + $0x78] sm:$0xff]
    %v72 = vld [vmem:[%s13 + $0x80] sm:$0xff]
    %v73 = vld [vmem:[%s13 + $0x88] sm:$0xff]
    %v74 = vld [vmem:[%s13 + $0x90] sm:$0xff]
    %v75 = vld [vmem:[%s13 + $0x98] sm:$0xff]
    %v76 = vld [vmem:[%s13 + $0xa0] sm:$0xff]
    %v77 = vld [vmem:[%s13 + $0xa8] sm:$0xff]
    %v78 = vld [vmem:[%s13 + $0xb0] sm:$0xff]
    %v79 = vld [vmem:[%s13 + $0xb8] sm:$0xff]
    %v80 = vld [vmem:[%s13 + $0xc0] sm:$0xff]
    %v81 = vld [vmem:[%s13 + $0xc8] sm:$0xff]
    %v82 = vld [vmem:[%s13 + $0xd0] sm:$0xff]
    %v83 = vld [vmem:[%s13 + $0xd8] sm:$0xff]
    %v84 = vld [vmem:[%s13 + $0xe0] sm:$0xff]
    %v85 = vld [vmem:[%s13 + $0xe8] sm:$0xff]
    %v86 = vld [vmem:[%s13 + $0xf0] sm:$0xff]
    %v87 = vld [vmem:[%s13 + $0xf8] sm:$0xff]
    %v88 = vld [vmem:[%s9] sm:$0xff]
    %v89 = vld [vmem:[%s9 + $0x8] sm:$0xff]
    %v90 = vld [vmem:[%s9 + $0x10] sm:$0xff]
    %v91 = vld [vmem:[%s9 + $0x18] sm:$0xff]
    %v92 = vld [vmem:[%s9 + $0x20] sm:$0xff]
    %v93 = vld [vmem:[%s9 + $0x28] sm:$0xff]
    %v94 = vld [vmem:[%s9 + $0x30] sm:$0xff]
    %v95 = vld [vmem:[%s9 + $0x38] sm:$0xff]
    %v96 = vld [vmem:[%s9 + $0x40] sm:$0xff]
    %v97 = vld [vmem:[%s9 + $0x48] sm:$0xff]
    %v98 = vld [vmem:[%s9 + $0x50] sm:$0xff]
    %v99 = vld [vmem:[%s9 + $0x58] sm:$0xff]
    %v100 = vld [vmem:[%s9 + $0x60] sm:$0xff]
    %v101 = vld [vmem:[%s9 + $0x68] sm:$0xff]
    %v102 = vld [vmem:[%s9 + $0x70] sm:$0xff]
    %v103 = vld [vmem:[%s9 + $0x78] sm:$0xff]
    %v104 = vld [vmem:[%s9 + $0x80] sm:$0xff]
    %v105 = vld [vmem:[%s9 + $0x88] sm:$0xff]
    %v106 = vld [vmem:[%s9 + $0x90] sm:$0xff]
    %v107 = vld [vmem:[%s9 + $0x98] sm:$0xff]
    %v108 = vld [vmem:[%s9 + $0xa0] sm:$0xff]
    %v109 = vld [vmem:[%s9 + $0xa8] sm:$0xff]
    %v110 = vld [vmem:[%s9 + $0xb0] sm:$0xff]
    %v111 = vld [vmem:[%s9 + $0xb8] sm:$0xff]
    %v112 = vld [vmem:[%s9 + $0xc0] sm:$0xff]
    %v113 = vld [vmem:[%s9 + $0xc8] sm:$0xff]
    %v114 = vld [vmem:[%s9 + $0xd0] sm:$0xff]
    %v115 = vld [vmem:[%s9 + $0xd8] sm:$0xff]
    %v116 = vld [vmem:[%s9 + $0xe0] sm:$0xff]
    %v117 = vld [vmem:[%s9 + $0xe8] sm:$0xff]
    %v118 = vld [vmem:[%s9 + $0xf0] sm:$0xff]
    %v119 = vld [vmem:[%s9 + $0xf8] sm:$0xff]
    %120 = vmatprep.subr.mxu0 0.0
    %121 = vmatpush1.msra.mxu0 %v88
    %122 = vmatprep.subr.mxu0 0.0
    %123 = vmatpush1.msra.mxu0 %v89
    %124 = vmatprep.subr.mxu0 0.0
    %125 = vmatpush1.msra.mxu0 %v90
    %126 = vmatprep.subr.mxu0 0.0
    %127 = vmatpush1.msra.mxu0 %v91
    %128 = vmatprep.subr.mxu0 0.0
    %129 = vmatpush1.msra.mxu0 %v92
    %130 = vmatprep.subr.mxu0 0.0
    %131 = vmatpush1.msra.mxu0 %v93
    %132 = vmatprep.subr.mxu0 0.0
    %133 = vmatpush1.msra.mxu0 %v94
    %134 = vmatprep.subr.mxu0 0.0
    %135 = vmatpush1.msra.mxu0 %v95
    %136 = vmatprep.subr.mxu0 0.0
    %137 = vmatpush1.msra.mxu0 %v96
    %138 = vmatprep.subr.mxu0 0.0
    %139 = vmatpush1.msra.mxu0 %v97
    %140 = vmatprep.subr.mxu0 0.0
    %141 = vmatpush1.msra.mxu0 %v98
    %142 = vmatprep.subr.mxu0 0.0
    %143 = vmatpush1.msra.mxu0 %v99
    %144 = vmatprep.subr.mxu0 0.0
    %145 = vmatpush1.msra.mxu0 %v100
    %146 = vmatprep.subr.mxu0 0.0
    %147 = vmatpush1.msra.mxu0 %v101
    %148 = vmatprep.subr.mxu0 0.0
    %149 = vmatpush1.msra.mxu0 %v102
    %150 = vmatprep.subr.mxu0 0.0
    %151 = vmatpush1.msra.mxu0 %v103
    %152 = vmatprep.subr.mxu0 0.0
    %153 = vmatpush1.msra.mxu0 %v104
    %154 = vmatprep.subr.mxu0 0.0
    %155 = vmatpush1.msra.mxu0 %v105
    %156 = vmatprep.subr.mxu0 0.0
    %157 = vmatpush1.msra.mxu0 %v106
    %158 = vmatprep.subr.mxu0 0.0
    %159 = vmatpush1.msra.mxu0 %v107
    %160 = vmatprep.subr.mxu0 0.0
    %161 = vmatpush1.msra.mxu0 %v108
    %162 = vmatprep.subr.mxu0 0.0
    %163 = vmatpush1.msra.mxu0 %v109
    %164 = vmatprep.subr.mxu0 0.0
    %165 = vmatpush1.msra.mxu0 %v110
    %166 = vmatprep.subr.mxu0 0.0
    %167 = vmatpush1.msra.mxu0 %v111
    %168 = vmatprep.subr.mxu0 0.0
    %169 = vmatpush1.msra.mxu0 %v112
    %170 = vmatprep.subr.mxu0 0.0
    %171 = vmatpush1.msra.mxu0 %v113
    %172 = vmatprep.subr.mxu0 0.0
    %173 = vmatpush1.msra.mxu0 %v114
    %174 = vmatprep.subr.mxu0 0.0
    %175 = vmatpush1.msra.mxu0 %v115
    %176 = vmatprep.subr.mxu0 0.0
    %177 = vmatpush1.msra.mxu0 %v116
    %178 = vmatprep.subr.mxu0 0.0
    %179 = vmatpush1.msra.mxu0 %v117
    %180 = vmatprep.subr.mxu0 0.0
    %181 = vmatpush1.msra.mxu0 %v118
    %182 = vmatprep.subr.mxu0 0.0
    %183 = vmatpush1.msra.mxu0 %v119
    %184 = vmatprep.mubr.f32.mxu0 %v49
    %185 = vmatmul.mubr.f32.gmra.mrb[0].mxu0 %v48
    %v186 = vpop.f32.mrb[0].mxu0
    %v187 = vadd.f32 0.0, %v186
    %v188 = vpop.f32.mrb[0].mxu0
    %189 = vmatprep.mubr.f32.mxu0 %v51
    %190 = vmatmul.mubr.f32.gmra.mrb[0].mxu0 %v50
    %v191 = vpop.f32.mrb[0].mxu0
    %v192 = vadd.f32 0.0, %v191
    %v193 = vpop.f32.mrb[0].mxu0
    %194 = vmatprep.mubr.f32.mxu0 %v53
    %195 = vmatmul.mubr.f32.gmra.mrb[0].mxu0 %v52
    %v196 = vpop.f32.mrb[0].mxu0
    %v197 = vadd.f32 0.0, %v196
    %v198 = vpop.f32.mrb[0].mxu0
    %199 = vmatprep.mubr.f32.mxu0 %v55
    %200 = vmatmul.mubr.f32.gmra.mrb[0].mxu0 %v54
    %v201 = vpop.f32.mrb[0].mxu0
    %v202 = vadd.f32 0.0, %v201
    %v203 = vpop.f32.mrb[0].mxu0
    %204 = vdwg.mxu0
    %v205 = vld [vmem:[%s1] sm:$0xff]
    %v206 = vld [vmem:[%s1 + $0x8] sm:$0xff]
    %v207 = vld [vmem:[%s1 + $0x10] sm:$0xff]
    %v208 = vld [vmem:[%s1 + $0x18] sm:$0xff]
    %v209 = vld [vmem:[%s2] sm:$0xff]
    %v210 = vld [vmem:[%s2 + $0x8] sm:$0xff]
    %v211 = vld [vmem:[%s2 + $0x10] sm:$0xff]
    %v212 = vld [vmem:[%s2 + $0x18] sm:$0xff]
    %214 = vset.pattern.permute.xlu0 0
    %215 = vperm.xlu0 %214, %v209
    %v216 = vpop.permute.xlu0 %215
    %219 = vset.pattern.permute.xlu0 0
    %220 = vperm.xlu0 %219, %v210
    %v221 = vpop.permute.xlu0 %220
    %224 = vset.pattern.permute.xlu0 0
    %225 = vperm.xlu0 %224, %v211
    %v226 = vpop.permute.xlu0 %225
    %229 = vset.pattern.permute.xlu0 0
    %230 = vperm.xlu0 %229, %v212
    %v231 = vpop.permute.xlu0 %230
    %vm233 = vcmask 261120
    %v235 = vsel %vm233, %v205, 0
    %v238 = vsel %vm233, %v206, 0
    %v241 = vsel %vm233, %v207, 0
    %v244 = vsel %vm233, %v208, 0
    %246 = vmatprep.subr.mxu0 0.0
    %247 = vmatpush1.msra.mxu0 %v187
    %248 = vmatprep.subr.mxu0 0.0
    %249 = vmatpush1.msra.mxu0 %v192
    %250 = vmatprep.subr.mxu0 0.0
    %251 = vmatpush1.msra.mxu0 %v197
    %252 = vmatprep.subr.mxu0 0.0
    %253 = vmatpush1.msra.mxu0 %v202
    %254 = vmatprep.subr.mxu0 0.0
    %255 = vmatpush1.msra.mxu0 0.0
    %256 = vmatprep.subr.mxu0 0.0
    %257 = vmatpush1.msra.mxu0 0.0
    %258 = vmatprep.subr.mxu0 0.0
    %259 = vmatpush1.msra.mxu0 0.0
    %260 = vmatprep.subr.mxu0 0.0
    %261 = vmatpush1.msra.mxu0 0.0
    %262 = vmatprep.subr.mxu0 0.0
    %263 = vmatpush1.msra.mxu0 0.0
    %264 = vmatprep.subr.mxu0 0.0
    %265 = vmatpush1.msra.mxu0 0.0
    %266 = vmatprep.subr.mxu0 0.0
    %267 = vmatpush1.msra.mxu0 0.0
    %268 = vmatprep.subr.mxu0 0.0
    %269 = vmatpush1.msra.mxu0 0.0
    %270 = vmatprep.subr.mxu0 0.0
    %271 = vmatpush1.msra.mxu0 0.0
    %272 = vmatprep.subr.mxu0 0.0
    %273 = vmatpush1.msra.mxu0 0.0
    %274 = vmatprep.subr.mxu0 0.0
    %275 = vmatpush1.msra.mxu0 0.0
    %276 = vmatprep.subr.mxu0 0.0
    %277 = vmatpush1.msra.mxu0 0.0
    %278 = vmatprep.subr.mxu0 0.0
    %279 = vmatpush1.msra.mxu0 0.0
    %280 = vmatprep.subr.mxu0 0.0
    %281 = vmatpush1.msra.mxu0 0.0
    %282 = vmatprep.subr.mxu0 0.0
    %283 = vmatpush1.msra.mxu0 0.0
    %284 = vmatprep.subr.mxu0 0.0
    %285 = vmatpush1.msra.mxu0 0.0
    %286 = vmatprep.subr.mxu0 0.0
    %287 = vmatpush1.msra.mxu0 0.0
    %288 = vmatprep.subr.mxu0 0.0
    %289 = vmatpush1.msra.mxu0 0.0
    %290 = vmatprep.subr.mxu0 0.0
    %291 = vmatpush1.msra.mxu0 0.0
    %292 = vmatprep.subr.mxu0 0.0
    %293 = vmatpush1.msra.mxu0 0.0
    %294 = vmatprep.subr.mxu0 0.0
    %295 = vmatpush1.msra.mxu0 0.0
    %296 = vmatprep.subr.mxu0 0.0
    %297 = vmatpush1.msra.mxu0 0.0
    %298 = vmatprep.subr.mxu0 0.0
    %299 = vmatpush1.msra.mxu0 0.0
    %300 = vmatprep.subr.mxu0 0.0
    %301 = vmatpush1.msra.mxu0 0.0
    %302 = vmatprep.subr.mxu0 0.0
    %303 = vmatpush1.msra.mxu0 0.0
    %304 = vmatprep.subr.mxu0 0.0
    %305 = vmatpush1.msra.mxu0 0.0
    %306 = vmatprep.subr.mxu0 0.0
    %307 = vmatpush1.msra.mxu0 0.0
    %308 = vmatprep.subr.mxu0 0.0
    %309 = vmatpush1.msra.mxu0 0.0
    %310 = vmatprep.mubr.f32.mxu0 0.0
    %311 = vmatmul.mubr.f32.gmra.mrb[0].mxu0 %v235
    %v312 = vpop.f32.mrb[0].mxu0
    %v313 = vadd.f32 %v216, %v312
    %v314 = vpop.f32.mrb[0].mxu0
    %315 = vmatprep.mubr.f32.mxu0 0.0
    %316 = vmatmul.mubr.f32.gmra.mrb[0].mxu0 %v238
    %v317 = vpop.f32.mrb[0].mxu0
    %v318 = vadd.f32 %v221, %v317
    %v319 = vpop.f32.mrb[0].mxu0
    %320 = vmatprep.mubr.f32.mxu0 0.0
    %321 = vmatmul.mubr.f32.gmra.mrb[0].mxu0 %v241
    %v322 = vpop.f32.mrb[0].mxu0
    %v323 = vadd.f32 %v226, %v322
    %v324 = vpop.f32.mrb[0].mxu0
    %325 = vmatprep.mubr.f32.mxu0 0.0
    %326 = vmatmul.mubr.f32.gmra.mrb[0].mxu0 %v244
    %v327 = vpop.f32.mrb[0].mxu0
    %v328 = vadd.f32 %v231, %v327
    %v329 = vpop.f32.mrb[0].mxu0
    %330 = vdwg.mxu0
    %v331 = vxor.u32 %v313, 2147483648
    %v332 = vxor.u32 %v318, 2147483648
    %v333 = vxor.u32 %v323, 2147483648
    %v334 = vxor.u32 %v328, 2147483648
    %v335 = vmul.f32 %v331, 1.442695
    %v336 = vpow.pop %v335
    %v337 = vmul.f32 %v332, 1.442695
    %v338 = vpow.pop %v337
    %v339 = vmul.f32 %v333, 1.442695
    %v340 = vpow.pop %v339
    %v341 = vmul.f32 %v334, 1.442695
    %v342 = vpow.pop %v341
    %v343 = vadd.f32 %v336, 1.0
    %v344 = vadd.f32 %v338, 1.0
    %v345 = vadd.f32 %v340, 1.0
    %v346 = vadd.f32 %v342, 1.0
    %v347 = vrcp.pop %v343
    %v348 = vmul.f32 1.0, %v347
    %v349 = vrcp.pop %v344
    %v350 = vmul.f32 1.0, %v349
    %v351 = vrcp.pop %v345
    %v352 = vmul.f32 1.0, %v351
    %v353 = vrcp.pop %v346
    %v354 = vmul.f32 1.0, %v353
    %v355 = vld [vmem:[%s10] sm:$0xff]
    %v356 = vld [vmem:[%s10 + $0x8] sm:$0xff]
    %v357 = vld [vmem:[%s10 + $0x10] sm:$0xff]
    %v358 = vld [vmem:[%s10 + $0x18] sm:$0xff]
    %v359 = vld [vmem:[%s10 + $0x20] sm:$0xff]
    %v360 = vld [vmem:[%s10 + $0x28] sm:$0xff]
    %v361 = vld [vmem:[%s10 + $0x30] sm:$0xff]
    %v362 = vld [vmem:[%s10 + $0x38] sm:$0xff]
    %v364 = vsel %vm233, %v348, 0
    %v367 = vsel %vm233, %v350, 0
    %v370 = vsel %vm233, %v352, 0
    %v373 = vsel %vm233, %v354, 0
    %375 = vmatprep.subr.mxu0 %v356
    %376 = vmatpush1.msra.mxu0 %v355
    %377 = vmatprep.subr.mxu0 %v358
    %378 = vmatpush1.msra.mxu0 %v357
    %379 = vmatprep.subr.mxu0 %v360
    %380 = vmatpush1.msra.mxu0 %v359
    %381 = vmatprep.subr.mxu0 %v362
    %382 = vmatpush1.msra.mxu0 %v361
    %383 = vmatprep.subr.mxu0 0.0
    %384 = vmatpush1.msra.mxu0 0.0
    %385 = vmatprep.subr.mxu0 0.0
    %386 = vmatpush1.msra.mxu0 0.0
    %387 = vmatprep.subr.mxu0 0.0
    %388 = vmatpush1.msra.mxu0 0.0
    %389 = vmatprep.subr.mxu0 0.0
    %390 = vmatpush1.msra.mxu0 0.0
    %391 = vmatprep.subr.mxu0 0.0
    %392 = vmatpush1.msra.mxu0 0.0
    %393 = vmatprep.subr.mxu0 0.0
    %394 = vmatpush1.msra.mxu0 0.0
    %395 = vmatprep.subr.mxu0 0.0
    %396 = vmatpush1.msra.mxu0 0.0
    %397 = vmatprep.subr.mxu0 0.0
    %398 = vmatpush1.msra.mxu0 0.0
    %399 = vmatprep.subr.mxu0 0.0
    %400 = vmatpush1.msra.mxu0 0.0
    %401 = vmatprep.subr.mxu0 0.0
    %402 = vmatpush1.msra.mxu0 0.0
    %403 = vmatprep.subr.mxu0 0.0
    %404 = vmatpush1.msra.mxu0 0.0
    %405 = vmatprep.subr.mxu0 0.0
    %406 = vmatpush1.msra.mxu0 0.0
    %407 = vmatprep.subr.mxu0 0.0
    %408 = vmatpush1.msra.mxu0 0.0
    %409 = vmatprep.subr.mxu0 0.0
    %410 = vmatpush1.msra.mxu0 0.0
    %411 = vmatprep.subr.mxu0 0.0
    %412 = vmatpush1.msra.mxu0 0.0
    %413 = vmatprep.subr.mxu0 0.0
    %414 = vmatpush1.msra.mxu0 0.0
    %415 = vmatprep.subr.mxu0 0.0
    %416 = vmatpush1.msra.mxu0 0.0
    %417 = vmatprep.subr.mxu0 0.0
    %418 = vmatpush1.msra.mxu0 0.0
    %419 = vmatprep.subr.mxu0 0.0
    %420 = vmatpush1.msra.mxu0 0.0
    %421 = vmatprep.subr.mxu0 0.0
    %422 = vmatpush1.msra.mxu0 0.0
    %423 = vmatprep.subr.mxu0 0.0
    %424 = vmatpush1.msra.mxu0 0.0
    %425 = vmatprep.subr.mxu0 0.0
    %426 = vmatpush1.msra.mxu0 0.0
    %427 = vmatprep.subr.mxu0 0.0
    %428 = vmatpush1.msra.mxu0 0.0
    %429 = vmatprep.subr.mxu0 0.0
    %430 = vmatpush1.msra.mxu0 0.0
    %431 = vmatprep.subr.mxu0 0.0
    %432 = vmatpush1.msra.mxu0 0.0
    %433 = vmatprep.subr.mxu0 0.0
    %434 = vmatpush1.msra.mxu0 0.0
    %435 = vmatprep.subr.mxu0 0.0
    %436 = vmatpush1.msra.mxu0 0.0
    %437 = vmatprep.subr.mxu0 0.0
    %438 = vmatpush1.msra.mxu0 0.0
    %439 = vmatprep.mubr.f32.mxu0 0.0
    %440 = vmatmul.mubr.f32.gmra.mrb[0].mxu0 %v364
    %v441 = vpop.f32.mrb[0].mxu0
    %v442 = vadd.f32 0.0, %v441
    %v443 = vpop.f32.mrb[0].mxu0
    %v444 = vadd.f32 0.0, %v443
    %445 = vmatprep.mubr.f32.mxu0 0.0
    %446 = vmatmul.mubr.f32.gmra.mrb[0].mxu0 %v367
    %v447 = vpop.f32.mrb[0].mxu0
    %v448 = vadd.f32 0.0, %v447
    %v449 = vpop.f32.mrb[0].mxu0
    %v450 = vadd.f32 0.0, %v449
    %451 = vmatprep.mubr.f32.mxu0 0.0
    %452 = vmatmul.mubr.f32.gmra.mrb[0].mxu0 %v370
    %v453 = vpop.f32.mrb[0].mxu0
    %v454 = vadd.f32 0.0, %v453
    %v455 = vpop.f32.mrb[0].mxu0
    %v456 = vadd.f32 0.0, %v455
    %457 = vmatprep.mubr.f32.mxu0 0.0
    %458 = vmatmul.mubr.f32.gmra.mrb[0].mxu0 %v373
    %v459 = vpop.f32.mrb[0].mxu0
    %v460 = vadd.f32 0.0, %v459
    %v461 = vpop.f32.mrb[0].mxu0
    %v462 = vadd.f32 0.0, %v461
    %463 = vdwg.mxu0
    %v464 = vld [vmem:[%s11] sm:$0xff]
    %v465 = vld [vmem:[%s11 + $0x8] sm:$0xff]
    %v466 = vld [vmem:[%s11 + $0x10] sm:$0xff]
    %v467 = vld [vmem:[%s11 + $0x18] sm:$0xff]
    %v468 = vld [vmem:[%s11 + $0x20] sm:$0xff]
    %v469 = vld [vmem:[%s11 + $0x28] sm:$0xff]
    %v470 = vld [vmem:[%s11 + $0x30] sm:$0xff]
    %v471 = vld [vmem:[%s11 + $0x38] sm:$0xff]
    %472 = vmatprep.subr.mxu0 %v465
    %473 = vmatpush1.msra.mxu0 %v464
    %474 = vmatprep.subr.mxu0 %v467
    %475 = vmatpush1.msra.mxu0 %v466
    %476 = vmatprep.subr.mxu0 %v469
    %477 = vmatpush1.msra.mxu0 %v468
    %478 = vmatprep.subr.mxu0 %v471
    %479 = vmatpush1.msra.mxu0 %v470
    %480 = vmatprep.subr.mxu0 0.0
    %481 = vmatpush1.msra.mxu0 0.0
    %482 = vmatprep.subr.mxu0 0.0
    %483 = vmatpush1.msra.mxu0 0.0
    %484 = vmatprep.subr.mxu0 0.0
    %485 = vmatpush1.msra.mxu0 0.0
    %486 = vmatprep.subr.mxu0 0.0
    %487 = vmatpush1.msra.mxu0 0.0
    %488 = vmatprep.subr.mxu0 0.0
    %489 = vmatpush1.msra.mxu0 0.0
    %490 = vmatprep.subr.mxu0 0.0
    %491 = vmatpush1.msra.mxu0 0.0
    %492 = vmatprep.subr.mxu0 0.0
    %493 = vmatpush1.msra.mxu0 0.0
    %494 = vmatprep.subr.mxu0 0.0
    %495 = vmatpush1.msra.mxu0 0.0
    %496 = vmatprep.subr.mxu0 0.0
    %497 = vmatpush1.msra.mxu0 0.0
    %498 = vmatprep.subr.mxu0 0.0
    %499 = vmatpush1.msra.mxu0 0.0
    %500 = vmatprep.subr.mxu0 0.0
    %501 = vmatpush1.msra.mxu0 0.0
    %502 = vmatprep.subr.mxu0 0.0
    %503 = vmatpush1.msra.mxu0 0.0
    %504 = vmatprep.subr.mxu0 0.0
    %505 = vmatpush1.msra.mxu0 0.0
    %506 = vmatprep.subr.mxu0 0.0
    %507 = vmatpush1.msra.mxu0 0.0
    %508 = vmatprep.subr.mxu0 0.0
    %509 = vmatpush1.msra.mxu0 0.0
    %510 = vmatprep.subr.mxu0 0.0
    %511 = vmatpush1.msra.mxu0 0.0
    %512 = vmatprep.subr.mxu0 0.0
    %513 = vmatpush1.msra.mxu0 0.0
    %514 = vmatprep.subr.mxu0 0.0
    %515 = vmatpush1.msra.mxu0 0.0
    %516 = vmatprep.subr.mxu0 0.0
    %517 = vmatpush1.msra.mxu0 0.0
    %518 = vmatprep.subr.mxu0 0.0
    %519 = vmatpush1.msra.mxu0 0.0
    %520 = vmatprep.subr.mxu0 0.0
    %521 = vmatpush1.msra.mxu0 0.0
    %522 = vmatprep.subr.mxu0 0.0
    %523 = vmatpush1.msra.mxu0 0.0
    %524 = vmatprep.subr.mxu0 0.0
    %525 = vmatpush1.msra.mxu0 0.0
    %526 = vmatprep.subr.mxu0 0.0
    %527 = vmatpush1.msra.mxu0 0.0
    %528 = vmatprep.subr.mxu0 0.0
    %529 = vmatpush1.msra.mxu0 0.0
    %530 = vmatprep.subr.mxu0 0.0
    %531 = vmatpush1.msra.mxu0 0.0
    %532 = vmatprep.subr.mxu0 0.0
    %533 = vmatpush1.msra.mxu0 0.0
    %534 = vmatprep.subr.mxu0 0.0
    %535 = vmatpush1.msra.mxu0 0.0
    %536 = vmatprep.mubr.f32.mxu0 0.0
    %537 = vmatmul.mubr.f32.gmra.mrb[0].mxu0 %v364
    %v538 = vpop.f32.mrb[0].mxu0
    %v539 = vadd.f32 0.0, %v538
    %v540 = vpop.f32.mrb[0].mxu0
    %v541 = vadd.f32 0.0, %v540
    %542 = vmatprep.mubr.f32.mxu0 0.0
    %543 = vmatmul.mubr.f32.gmra.mrb[0].mxu0 %v367
    %v544 = vpop.f32.mrb[0].mxu0
    %v545 = vadd.f32 0.0, %v544
    %v546 = vpop.f32.mrb[0].mxu0
    %v547 = vadd.f32 0.0, %v546
    %548 = vmatprep.mubr.f32.mxu0 0.0
    %549 = vmatmul.mubr.f32.gmra.mrb[0].mxu0 %v370
    %v550 = vpop.f32.mrb[0].mxu0
    %v551 = vadd.f32 0.0, %v550
    %v552 = vpop.f32.mrb[0].mxu0
    %v553 = vadd.f32 0.0, %v552
    %554 = vmatprep.mubr.f32.mxu0 0.0
    %555 = vmatmul.mubr.f32.gmra.mrb[0].mxu0 %v373
    %v556 = vpop.f32.mrb[0].mxu0
    %v557 = vadd.f32 0.0, %v556
    %v558 = vpop.f32.mrb[0].mxu0
    %v559 = vadd.f32 0.0, %v558
    %560 = vdwg.mxu0
    %v561 = vmul.f32 %v442, %v539
    %v562 = vmul.f32 %v444, %v541
    %v563 = vmul.f32 %v448, %v545
    %v564 = vmul.f32 %v450, %v547
    %v565 = vmul.f32 %v454, %v551
    %v566 = vmul.f32 %v456, %v553
    %v567 = vmul.f32 %v460, %v557
    %v568 = vmul.f32 %v462, %v559
    %v569 = vmul.f32 %v48, %v561
    %v570 = vmul.f32 %v49, %v562
    %v571 = vmul.f32 %v50, %v563
    %v572 = vmul.f32 %v51, %v564
    %v573 = vmul.f32 %v52, %v565
    %v574 = vmul.f32 %v53, %v566
    %v575 = vmul.f32 %v54, %v567
    %v576 = vmul.f32 %v55, %v568
    %v577 = vld [vmem:[%s7] sm:$0xff]
    %v578 = vld [vmem:[%s7 + $0x8] sm:$0xff]
    %v579 = vld [vmem:[%s7 + $0x10] sm:$0xff]
    %v580 = vld [vmem:[%s7 + $0x18] sm:$0xff]
    %581 = vmatprep.subr.mxu0 0.0
    %582 = vmatpush1.msra.mxu0 %v56
    %583 = vmatprep.subr.mxu0 0.0
    %584 = vmatpush1.msra.mxu0 %v57
    %585 = vmatprep.subr.mxu0 0.0
    %586 = vmatpush1.msra.mxu0 %v58
    %587 = vmatprep.subr.mxu0 0.0
    %588 = vmatpush1.msra.mxu0 %v59
    %589 = vmatprep.subr.mxu0 0.0
    %590 = vmatpush1.msra.mxu0 %v60
    %591 = vmatprep.subr.mxu0 0.0
    %592 = vmatpush1.msra.mxu0 %v61
    %593 = vmatprep.subr.mxu0 0.0
    %594 = vmatpush1.msra.mxu0 %v62
    %595 = vmatprep.subr.mxu0 0.0
    %596 = vmatpush1.msra.mxu0 %v63
    %597 = vmatprep.subr.mxu0 0.0
    %598 = vmatpush1.msra.mxu0 %v64
    %599 = vmatprep.subr.mxu0 0.0
    %600 = vmatpush1.msra.mxu0 %v65
    %601 = vmatprep.subr.mxu0 0.0
    %602 = vmatpush1.msra.mxu0 %v66
    %603 = vmatprep.subr.mxu0 0.0
    %604 = vmatpush1.msra.mxu0 %v67
    %605 = vmatprep.subr.mxu0 0.0
    %606 = vmatpush1.msra.mxu0 %v68
    %607 = vmatprep.subr.mxu0 0.0
    %608 = vmatpush1.msra.mxu0 %v69
    %609 = vmatprep.subr.mxu0 0.0
    %610 = vmatpush1.msra.mxu0 %v70
    %611 = vmatprep.subr.mxu0 0.0
    %612 = vmatpush1.msra.mxu0 %v71
    %613 = vmatprep.subr.mxu0 0.0
    %614 = vmatpush1.msra.mxu0 %v72
    %615 = vmatprep.subr.mxu0 0.0
    %616 = vmatpush1.msra.mxu0 %v73
    %617 = vmatprep.subr.mxu0 0.0
    %618 = vmatpush1.msra.mxu0 %v74
    %619 = vmatprep.subr.mxu0 0.0
    %620 = vmatpush1.msra.mxu0 %v75
    %621 = vmatprep.subr.mxu0 0.0
    %622 = vmatpush1.msra.mxu0 %v76
    %623 = vmatprep.subr.mxu0 0.0
    %624 = vmatpush1.msra.mxu0 %v77
    %625 = vmatprep.subr.mxu0 0.0
    %626 = vmatpush1.msra.mxu0 %v78
    %627 = vmatprep.subr.mxu0 0.0
    %628 = vmatpush1.msra.mxu0 %v79
    %629 = vmatprep.subr.mxu0 0.0
    %630 = vmatpush1.msra.mxu0 %v80
    %631 = vmatprep.subr.mxu0 0.0
    %632 = vmatpush1.msra.mxu0 %v81
    %633 = vmatprep.subr.mxu0 0.0
    %634 = vmatpush1.msra.mxu0 %v82
    %635 = vmatprep.subr.mxu0 0.0
    %636 = vmatpush1.msra.mxu0 %v83
    %637 = vmatprep.subr.mxu0 0.0
    %638 = vmatpush1.msra.mxu0 %v84
    %639 = vmatprep.subr.mxu0 0.0
    %640 = vmatpush1.msra.mxu0 %v85
    %641 = vmatprep.subr.mxu0 0.0
    %642 = vmatpush1.msra.mxu0 %v86
    %643 = vmatprep.subr.mxu0 0.0
    %644 = vmatpush1.msra.mxu0 %v87
    %645 = vmatprep.mubr.f32.mxu0 %v570
    %646 = vmatmul.mubr.f32.gmra.mrb[0].mxu0 %v569
    %v647 = vpop.f32.mrb[0].mxu0
    %v648 = vadd.f32 0.0, %v647
    %v649 = vpop.f32.mrb[0].mxu0
    %650 = vmatprep.mubr.f32.mxu0 %v572
    %651 = vmatmul.mubr.f32.gmra.mrb[0].mxu0 %v571
    %v652 = vpop.f32.mrb[0].mxu0
    %v653 = vadd.f32 0.0, %v652
    %v654 = vpop.f32.mrb[0].mxu0
    %655 = vmatprep.mubr.f32.mxu0 %v574
    %656 = vmatmul.mubr.f32.gmra.mrb[0].mxu0 %v573
    %v657 = vpop.f32.mrb[0].mxu0
    %v658 = vadd.f32 0.0, %v657
    %v659 = vpop.f32.mrb[0].mxu0
    %660 = vmatprep.mubr.f32.mxu0 %v576
    %661 = vmatmul.mubr.f32.gmra.mrb[0].mxu0 %v575
    %v662 = vpop.f32.mrb[0].mxu0
    %v663 = vadd.f32 0.0, %v662
    %v664 = vpop.f32.mrb[0].mxu0
    %665 = vdwg.mxu0
    %v667 = vsel %vm233, %v577, 0
    %v670 = vsel %vm233, %v578, 0
    %v673 = vsel %vm233, %v579, 0
    %v676 = vsel %vm233, %v580, 0
    %678 = vmatprep.subr.mxu0 0.0
    %679 = vmatpush1.msra.mxu0 %v648
    %680 = vmatprep.subr.mxu0 0.0
    %681 = vmatpush1.msra.mxu0 %v653
    %682 = vmatprep.subr.mxu0 0.0
    %683 = vmatpush1.msra.mxu0 %v658
    %684 = vmatprep.subr.mxu0 0.0
    %685 = vmatpush1.msra.mxu0 %v663
    %686 = vmatprep.subr.mxu0 0.0
    %687 = vmatpush1.msra.mxu0 0.0
    %688 = vmatprep.subr.mxu0 0.0
    %689 = vmatpush1.msra.mxu0 0.0
    %690 = vmatprep.subr.mxu0 0.0
    %691 = vmatpush1.msra.mxu0 0.0
    %692 = vmatprep.subr.mxu0 0.0
    %693 = vmatpush1.msra.mxu0 0.0
    %694 = vmatprep.subr.mxu0 0.0
    %695 = vmatpush1.msra.mxu0 0.0
    %696 = vmatprep.subr.mxu0 0.0
    %697 = vmatpush1.msra.mxu0 0.0
    %698 = vmatprep.subr.mxu0 0.0
    %699 = vmatpush1.msra.mxu0 0.0
    %700 = vmatprep.subr.mxu0 0.0
    %701 = vmatpush1.msra.mxu0 0.0
    %702 = vmatprep.subr.mxu0 0.0
    %703 = vmatpush1.msra.mxu0 0.0
    %704 = vmatprep.subr.mxu0 0.0
    %705 = vmatpush1.msra.mxu0 0.0
    %706 = vmatprep.subr.mxu0 0.0
    %707 = vmatpush1.msra.mxu0 0.0
    %708 = vmatprep.subr.mxu0 0.0
    %709 = vmatpush1.msra.mxu0 0.0
    %710 = vmatprep.subr.mxu0 0.0
    %711 = vmatpush1.msra.mxu0 0.0
    %712 = vmatprep.subr.mxu0 0.0
    %713 = vmatpush1.msra.mxu0 0.0
    %714 = vmatprep.subr.mxu0 0.0
    %715 = vmatpush1.msra.mxu0 0.0
    %716 = vmatprep.subr.mxu0 0.0
    %717 = vmatpush1.msra.mxu0 0.0
    %718 = vmatprep.subr.mxu0 0.0
    %719 = vmatpush1.msra.mxu0 0.0
    %720 = vmatprep.subr.mxu0 0.0
    %721 = vmatpush1.msra.mxu0 0.0
    %722 = vmatprep.subr.mxu0 0.0
    %723 = vmatpush1.msra.mxu0 0.0
    %724 = vmatprep.subr.mxu0 0.0
    %725 = vmatpush1.msra.mxu0 0.0
    %726 = vmatprep.subr.mxu0 0.0
    %727 = vmatpush1.msra.mxu0 0.0
    %728 = vmatprep.subr.mxu0 0.0
    %729 = vmatpush1.msra.mxu0 0.0
    %730 = vmatprep.subr.mxu0 0.0
    %731 = vmatpush1.msra.mxu0 0.0
    %732 = vmatprep.subr.mxu0 0.0
    %733 = vmatpush1.msra.mxu0 0.0
    %734 = vmatprep.subr.mxu0 0.0
    %735 = vmatpush1.msra.mxu0 0.0
    %736 = vmatprep.subr.mxu0 0.0
    %737 = vmatpush1.msra.mxu0 0.0
    %738 = vmatprep.subr.mxu0 0.0
    %739 = vmatpush1.msra.mxu0 0.0
    %740 = vmatprep.subr.mxu0 0.0
    %741 = vmatpush1.msra.mxu0 0.0
    %742 = vmatprep.mubr.f32.mxu0 0.0
    %743 = vmatmul.mubr.f32.gmra.mrb[0].mxu0 %v667
    %v744 = vpop.f32.mrb[0].mxu0
    %v745 = vadd.f32 0.0, %v744
    %v746 = vpop.f32.mrb[0].mxu0
    %747 = vmatprep.mubr.f32.mxu0 0.0
    %748 = vmatmul.mubr.f32.gmra.mrb[0].mxu0 %v670
    %v749 = vpop.f32.mrb[0].mxu0
    %v750 = vadd.f32 0.0, %v749
    %v751 = vpop.f32.mrb[0].mxu0
    %752 = vmatprep.mubr.f32.mxu0 0.0
    %753 = vmatmul.mubr.f32.gmra.mrb[0].mxu0 %v673
    %v754 = vpop.f32.mrb[0].mxu0
    %v755 = vadd.f32 0.0, %v754
    %v756 = vpop.f32.mrb[0].mxu0
    %757 = vmatprep.mubr.f32.mxu0 0.0
    %758 = vmatmul.mubr.f32.gmra.mrb[0].mxu0 %v676
    %v759 = vpop.f32.mrb[0].mxu0
    %v760 = vadd.f32 0.0, %v759
    %v761 = vpop.f32.mrb[0].mxu0
    %762 = vdwg.mxu0
    %764 = vset.pattern.permute.xlu0 0
    %765 = vperm.xlu0 %764, %v745
    %v766 = vpop.permute.xlu0 %765
    %769 = vset.pattern.permute.xlu0 0
    %770 = vperm.xlu0 %769, %v750
    %v771 = vpop.permute.xlu0 %770
    %774 = vset.pattern.permute.xlu0 0
    %775 = vperm.xlu0 %774, %v755
    %v776 = vpop.permute.xlu0 %775
    %779 = vset.pattern.permute.xlu0 0
    %780 = vperm.xlu0 %779, %v760
    %v781 = vpop.permute.xlu0 %780
    %v783 = vsub.f32 %v569, %v766
    %v784 = vsub.f32 %v570, %v766
    %v785 = vsub.f32 %v571, %v771
    %v786 = vsub.f32 %v572, %v771
    %v787 = vsub.f32 %v573, %v776
    %v788 = vsub.f32 %v574, %v776
    %v789 = vsub.f32 %v575, %v781
    %v790 = vsub.f32 %v576, %v781
    %v791 = vmul.f32 %v783, %v783
    %v792 = vmul.f32 %v784, %v784
    %v793 = vmul.f32 %v785, %v785
    %v794 = vmul.f32 %v786, %v786
    %v795 = vmul.f32 %v787, %v787
    %v796 = vmul.f32 %v788, %v788
    %v797 = vmul.f32 %v789, %v789
    %v798 = vmul.f32 %v790, %v790
    %799 = vmatprep.subr.mxu0 0.0
    %800 = vmatpush1.msra.mxu0 %v56
    %801 = vmatprep.subr.mxu0 0.0
    %802 = vmatpush1.msra.mxu0 %v57
    %803 = vmatprep.subr.mxu0 0.0
    %804 = vmatpush1.msra.mxu0 %v58
    %805 = vmatprep.subr.mxu0 0.0
    %806 = vmatpush1.msra.mxu0 %v59
    %807 = vmatprep.subr.mxu0 0.0
    %808 = vmatpush1.msra.mxu0 %v60
    %809 = vmatprep.subr.mxu0 0.0
    %810 = vmatpush1.msra.mxu0 %v61
    %811 = vmatprep.subr.mxu0 0.0
    %812 = vmatpush1.msra.mxu0 %v62
    %813 = vmatprep.subr.mxu0 0.0
    %814 = vmatpush1.msra.mxu0 %v63
    %815 = vmatprep.subr.mxu0 0.0
    %816 = vmatpush1.msra.mxu0 %v64
    %817 = vmatprep.subr.mxu0 0.0
    %818 = vmatpush1.msra.mxu0 %v65
    %819 = vmatprep.subr.mxu0 0.0
    %820 = vmatpush1.msra.mxu0 %v66
    %821 = vmatprep.subr.mxu0 0.0
    %822 = vmatpush1.msra.mxu0 %v67
    %823 = vmatprep.subr.mxu0 0.0
    %824 = vmatpush1.msra.mxu0 %v68
    %825 = vmatprep.subr.mxu0 0.0
    %826 = vmatpush1.msra.mxu0 %v69
    %827 = vmatprep.subr.mxu0 0.0
    %828 = vmatpush1.msra.mxu0 %v70
    %829 = vmatprep.subr.mxu0 0.0
    %830 = vmatpush1.msra.mxu0 %v71
    %831 = vmatprep.subr.mxu0 0.0
    %832 = vmatpush1.msra.mxu0 %v72
    %833 = vmatprep.subr.mxu0 0.0
    %834 = vmatpush1.msra.mxu0 %v73
    %835 = vmatprep.subr.mxu0 0.0
    %836 = vmatpush1.msra.mxu0 %v74
    %837 = vmatprep.subr.mxu0 0.0
    %838 = vmatpush1.msra.mxu0 %v75
    %839 = vmatprep.subr.mxu0 0.0
    %840 = vmatpush1.msra.mxu0 %v76
    %841 = vmatprep.subr.mxu0 0.0
    %842 = vmatpush1.msra.mxu0 %v77
    %843 = vmatprep.subr.mxu0 0.0
    %844 = vmatpush1.msra.mxu0 %v78
    %845 = vmatprep.subr.mxu0 0.0
    %846 = vmatpush1.msra.mxu0 %v79
    %847 = vmatprep.subr.mxu0 0.0
    %848 = vmatpush1.msra.mxu0 %v80
    %849 = vmatprep.subr.mxu0 0.0
    %850 = vmatpush1.msra.mxu0 %v81
    %851 = vmatprep.subr.mxu0 0.0
    %852 = vmatpush1.msra.mxu0 %v82
    %853 = vmatprep.subr.mxu0 0.0
    %854 = vmatpush1.msra.mxu0 %v83
    %855 = vmatprep.subr.mxu0 0.0
    %856 = vmatpush1.msra.mxu0 %v84
    %857 = vmatprep.subr.mxu0 0.0
    %858 = vmatpush1.msra.mxu0 %v85
    %859 = vmatprep.subr.mxu0 0.0
    %860 = vmatpush1.msra.mxu0 %v86
    %861 = vmatprep.subr.mxu0 0.0
    %862 = vmatpush1.msra.mxu0 %v87
    %863 = vmatprep.mubr.f32.mxu0 %v792
    %864 = vmatmul.mubr.f32.gmra.mrb[0].mxu0 %v791
    %v865 = vpop.f32.mrb[0].mxu0
    %v866 = vadd.f32 0.0, %v865
    %v867 = vpop.f32.mrb[0].mxu0
    %868 = vmatprep.mubr.f32.mxu0 %v794
    %869 = vmatmul.mubr.f32.gmra.mrb[0].mxu0 %v793
    %v870 = vpop.f32.mrb[0].mxu0
    %v871 = vadd.f32 0.0, %v870
    %v872 = vpop.f32.mrb[0].mxu0
    %873 = vmatprep.mubr.f32.mxu0 %v796
    %874 = vmatmul.mubr.f32.gmra.mrb[0].mxu0 %v795
    %v875 = vpop.f32.mrb[0].mxu0
    %v876 = vadd.f32 0.0, %v875
    %v877 = vpop.f32.mrb[0].mxu0
    %878 = vmatprep.mubr.f32.mxu0 %v798
    %879 = vmatmul.mubr.f32.gmra.mrb[0].mxu0 %v797
    %v880 = vpop.f32.mrb[0].mxu0
    %v881 = vadd.f32 0.0, %v880
    %v882 = vpop.f32.mrb[0].mxu0
    %883 = vdwg.mxu0
    %884 = vmatprep.subr.mxu0 0.0
    %885 = vmatpush1.msra.mxu0 %v866
    %886 = vmatprep.subr.mxu0 0.0
    %887 = vmatpush1.msra.mxu0 %v871
    %888 = vmatprep.subr.mxu0 0.0
    %889 = vmatpush1.msra.mxu0 %v876
    %890 = vmatprep.subr.mxu0 0.0
    %891 = vmatpush1.msra.mxu0 %v881
    %892 = vmatprep.subr.mxu0 0.0
    %893 = vmatpush1.msra.mxu0 0.0
    %894 = vmatprep.subr.mxu0 0.0
    %895 = vmatpush1.msra.mxu0 0.0
    %896 = vmatprep.subr.mxu0 0.0
    %897 = vmatpush1.msra.mxu0 0.0
    %898 = vmatprep.subr.mxu0 0.0
    %899 = vmatpush1.msra.mxu0 0.0
    %900 = vmatprep.subr.mxu0 0.0
    %901 = vmatpush1.msra.mxu0 0.0
    %902 = vmatprep.subr.mxu0 0.0
    %903 = vmatpush1.msra.mxu0 0.0
    %904 = vmatprep.subr.mxu0 0.0
    %905 = vmatpush1.msra.mxu0 0.0
    %906 = vmatprep.subr.mxu0 0.0
    %907 = vmatpush1.msra.mxu0 0.0
    %908 = vmatprep.subr.mxu0 0.0
    %909 = vmatpush1.msra.mxu0 0.0
    %910 = vmatprep.subr.mxu0 0.0
    %911 = vmatpush1.msra.mxu0 0.0
    %912 = vmatprep.subr.mxu0 0.0
    %913 = vmatpush1.msra.mxu0 0.0
    %914 = vmatprep.subr.mxu0 0.0
    %915 = vmatpush1.msra.mxu0 0.0
    %916 = vmatprep.subr.mxu0 0.0
    %917 = vmatpush1.msra.mxu0 0.0
    %918 = vmatprep.subr.mxu0 0.0
    %919 = vmatpush1.msra.mxu0 0.0
    %920 = vmatprep.subr.mxu0 0.0
    %921 = vmatpush1.msra.mxu0 0.0
    %922 = vmatprep.subr.mxu0 0.0
    %923 = vmatpush1.msra.mxu0 0.0
    %924 = vmatprep.subr.mxu0 0.0
    %925 = vmatpush1.msra.mxu0 0.0
    %926 = vmatprep.subr.mxu0 0.0
    %927 = vmatpush1.msra.mxu0 0.0
    %928 = vmatprep.subr.mxu0 0.0
    %929 = vmatpush1.msra.mxu0 0.0
    %930 = vmatprep.subr.mxu0 0.0
    %931 = vmatpush1.msra.mxu0 0.0
    %932 = vmatprep.subr.mxu0 0.0
    %933 = vmatpush1.msra.mxu0 0.0
    %934 = vmatprep.subr.mxu0 0.0
    %935 = vmatpush1.msra.mxu0 0.0
    %936 = vmatprep.subr.mxu0 0.0
    %937 = vmatpush1.msra.mxu0 0.0
    %938 = vmatprep.subr.mxu0 0.0
    %939 = vmatpush1.msra.mxu0 0.0
    %940 = vmatprep.subr.mxu0 0.0
    %941 = vmatpush1.msra.mxu0 0.0
    %942 = vmatprep.subr.mxu0 0.0
    %943 = vmatpush1.msra.mxu0 0.0
    %944 = vmatprep.subr.mxu0 0.0
    %945 = vmatpush1.msra.mxu0 0.0
    %946 = vmatprep.subr.mxu0 0.0
    %947 = vmatpush1.msra.mxu0 0.0
    %948 = vmatprep.mubr.f32.mxu0 0.0
    %949 = vmatmul.mubr.f32.gmra.mrb[0].mxu0 %v667
    %v950 = vpop.f32.mrb[0].mxu0
    %v951 = vadd.f32 1e-05, %v950
    %v952 = vpop.f32.mrb[0].mxu0
    %953 = vmatprep.mubr.f32.mxu0 0.0
    %954 = vmatmul.mubr.f32.gmra.mrb[0].mxu0 %v670
    %v955 = vpop.f32.mrb[0].mxu0
    %v956 = vadd.f32 1e-05, %v955
    %v957 = vpop.f32.mrb[0].mxu0
    %958 = vmatprep.mubr.f32.mxu0 0.0
    %959 = vmatmul.mubr.f32.gmra.mrb[0].mxu0 %v673
    %v960 = vpop.f32.mrb[0].mxu0
    %v961 = vadd.f32 1e-05, %v960
    %v962 = vpop.f32.mrb[0].mxu0
    %963 = vmatprep.mubr.f32.mxu0 0.0
    %964 = vmatmul.mubr.f32.gmra.mrb[0].mxu0 %v676
    %v965 = vpop.f32.mrb[0].mxu0
    %v966 = vadd.f32 1e-05, %v965
    %v967 = vpop.f32.mrb[0].mxu0
    %968 = vdwg.mxu0
    %v969 = vrsqrt.pop %v951
    %v970 = vrsqrt.pop %v956
    %v971 = vrsqrt.pop %v961
    %v972 = vrsqrt.pop %v966
    %v973 = vld [vmem:[%s5] sm:$0xff]
    %v974 = vld [vmem:[%s5 + $0x8] sm:$0xff]
    %v975 = vld [vmem:[%s5 + $0x10] sm:$0xff]
    %v976 = vld [vmem:[%s5 + $0x18] sm:$0xff]
    %v977 = vmul.f32 %v969, %v973
    %v978 = vmul.f32 %v970, %v974
    %v979 = vmul.f32 %v971, %v975
    %v980 = vmul.f32 %v972, %v976
    %982 = vset.pattern.permute.xlu0 0
    %983 = vperm.xlu0 %982, %v977
    %v984 = vpop.permute.xlu0 %983
    %987 = vset.pattern.permute.xlu0 0
    %988 = vperm.xlu0 %987, %v978
    %v989 = vpop.permute.xlu0 %988
    %992 = vset.pattern.permute.xlu0 0
    %993 = vperm.xlu0 %992, %v979
    %v994 = vpop.permute.xlu0 %993
    %997 = vset.pattern.permute.xlu0 0
    %998 = vperm.xlu0 %997, %v980
    %v999 = vpop.permute.xlu0 %998
    %v1001 = vmul.f32 %v783, %v984
    %v1002 = vmul.f32 %v784, %v984
    %v1003 = vmul.f32 %v785, %v989
    %v1004 = vmul.f32 %v786, %v989
    %v1005 = vmul.f32 %v787, %v994
    %v1006 = vmul.f32 %v788, %v994
    %v1007 = vmul.f32 %v789, %v999
    %v1008 = vmul.f32 %v790, %v999
    %v1009 = vld [vmem:[%s6] sm:$0xff]
    %v1010 = vld [vmem:[%s6 + $0x8] sm:$0xff]
    %v1011 = vld [vmem:[%s6 + $0x10] sm:$0xff]
    %v1012 = vld [vmem:[%s6 + $0x18] sm:$0xff]
    %1014 = vset.pattern.permute.xlu0 0
    %1015 = vperm.xlu0 %1014, %v1009
    %v1016 = vpop.permute.xlu0 %1015
    %1019 = vset.pattern.permute.xlu0 0
    %1020 = vperm.xlu0 %1019, %v1010
    %v1021 = vpop.permute.xlu0 %1020
    %1024 = vset.pattern.permute.xlu0 0
    %1025 = vperm.xlu0 %1024, %v1011
    %v1026 = vpop.permute.xlu0 %1025
    %1029 = vset.pattern.permute.xlu0 0
    %1030 = vperm.xlu0 %1029, %v1012
    %v1031 = vpop.permute.xlu0 %1030
    %v1033 = vadd.f32 %v1001, %v1016
    %v1034 = vadd.f32 %v1002, %v1016
    %v1035 = vadd.f32 %v1003, %v1021
    %v1036 = vadd.f32 %v1004, %v1021
    %v1037 = vadd.f32 %v1005, %v1026
    %v1038 = vadd.f32 %v1006, %v1026
    %v1039 = vadd.f32 %v1007, %v1031
    %v1040 = vadd.f32 %v1008, %v1031
    %1041 = vrot.lane.b32.xlu0 %v48, 17
    %v1042 = vpop.permute.xlu0 %1041
    %1043 = vrot.lane.b32.xlu0 %v50, 17
    %v1044 = vpop.permute.xlu0 %1043
    %1045 = vrot.lane.b32.xlu0 %v52, 17
    %v1046 = vpop.permute.xlu0 %1045
    %1047 = vrot.lane.b32.xlu0 %v54, 17
    %v1048 = vpop.permute.xlu0 %1047
    %1049 = vrot.lane.b32.xlu0 %v49, 17
    %v1050 = vpop.permute.xlu0 %1049
    %1051 = vrot.lane.b32.xlu0 %v51, 17
    %v1052 = vpop.permute.xlu0 %1051
    %1053 = vrot.lane.b32.xlu0 %v53, 17
    %v1054 = vpop.permute.xlu0 %1053
    %1055 = vrot.lane.b32.xlu0 %v55, 17
    %v1056 = vpop.permute.xlu0 %1055
    %v1057 = vlaneseq
    %v1058 = vand.u32 %v1057, 127
    %vm1059 = vcmp.lt.s32.totalorder %v1058, 17
    %v1060 = vsel %vm1059, %v1042, %v1050
    %v1061 = vsel %vm1059, %v1044, %v1052
    %v1062 = vsel %vm1059, %v1046, %v1054
    %v1063 = vsel %vm1059, %v1048, %v1056
    %v1064 = vsel %vm1059, %v1050, %v1042
    %v1065 = vsel %vm1059, %v1052, %v1044
    %v1066 = vsel %vm1059, %v1054, %v1046
    %v1067 = vsel %vm1059, %v1056, %v1048
    %v1068 = vld [vmem:[%s12] ss:$8 sm:$0x3]
    %v1070 = vlaneseq
    %v1071 = vshrl.u32 %v1070, 7
    %v1072 = vsub.s32 0, %v1071
    %v1073 = vrot.slane %v1068, %v1072
    %v1074 = vlaneseq
    %v1075 = vshrl.u32 %v1074, 7
    %v1076 = vsub.s32 1, %v1075
    %v1077 = vrot.slane %v1068, %v1076
    %v1080 = vmul.f32 %v1064, %v1073
    %v1081 = vmul.f32 %v1060, %v1077
    %v1082 = vmul.f32 %v1065, %v1073
    %v1083 = vmul.f32 %v1061, %v1077
    %v1084 = vmul.f32 %v1066, %v1073
    %v1085 = vmul.f32 %v1062, %v1077
    %v1086 = vmul.f32 %v1067, %v1073
    %v1087 = vmul.f32 %v1063, %v1077
    %1088 = vrot.lane.b32.xlu0 %v48, 16
    %v1089 = vpop.permute.xlu0 %1088
    %1090 = vrot.lane.b32.xlu0 %v50, 16
    %v1091 = vpop.permute.xlu0 %1090
    %1092 = vrot.lane.b32.xlu0 %v52, 16
    %v1093 = vpop.permute.xlu0 %1092
    %1094 = vrot.lane.b32.xlu0 %v54, 16
    %v1095 = vpop.permute.xlu0 %1094
    %1096 = vrot.lane.b32.xlu0 %v49, 16
    %v1097 = vpop.permute.xlu0 %1096
    %1098 = vrot.lane.b32.xlu0 %v51, 16
    %v1099 = vpop.permute.xlu0 %1098
    %1100 = vrot.lane.b32.xlu0 %v53, 16
    %v1101 = vpop.permute.xlu0 %1100
    %1102 = vrot.lane.b32.xlu0 %v55, 16
    %v1103 = vpop.permute.xlu0 %1102
    %vm1104 = vcmp.lt.s32.totalorder %v1058, 16
    %v1105 = vsel %vm1104, %v1089, %v1097
    %v1106 = vsel %vm1104, %v1091, %v1099
    %v1107 = vsel %vm1104, %v1093, %v1101
    %v1108 = vsel %vm1104, %v1095, %v1103
    %v1109 = vsel %vm1104, %v1097, %v1089
    %v1110 = vsel %vm1104, %v1099, %v1091
    %v1111 = vsel %vm1104, %v1101, %v1093
    %v1112 = vsel %vm1104, %v1103, %v1095
    %s1113 = scalar_lea.vmem %s12, 1
    %v1114 = vld [vmem:[%s1113] ss:$8 sm:$0x3]
    %v1116 = vlaneseq
    %v1117 = vshrl.u32 %v1116, 7
    %v1118 = vsub.s32 0, %v1117
    %v1119 = vrot.slane %v1114, %v1118
    %v1120 = vlaneseq
    %v1121 = vshrl.u32 %v1120, 7
    %v1122 = vsub.s32 1, %v1121
    %v1123 = vrot.slane %v1114, %v1122
    %v1126 = vmul.f32 %v1109, %v1119
    %v1127 = vmul.f32 %v1105, %v1123
    %v1128 = vmul.f32 %v1110, %v1119
    %v1129 = vmul.f32 %v1106, %v1123
    %v1130 = vmul.f32 %v1111, %v1119
    %v1131 = vmul.f32 %v1107, %v1123
    %v1132 = vmul.f32 %v1112, %v1119
    %v1133 = vmul.f32 %v1108, %v1123
    %1134 = vrot.lane.b32.xlu0 %v48, 15
    %v1135 = vpop.permute.xlu0 %1134
    %1136 = vrot.lane.b32.xlu0 %v50, 15
    %v1137 = vpop.permute.xlu0 %1136
    %1138 = vrot.lane.b32.xlu0 %v52, 15
    %v1139 = vpop.permute.xlu0 %1138
    %1140 = vrot.lane.b32.xlu0 %v54, 15
    %v1141 = vpop.permute.xlu0 %1140
    %1142 = vrot.lane.b32.xlu0 %v49, 15
    %v1143 = vpop.permute.xlu0 %1142
    %1144 = vrot.lane.b32.xlu0 %v51, 15
    %v1145 = vpop.permute.xlu0 %1144
    %1146 = vrot.lane.b32.xlu0 %v53, 15
    %v1147 = vpop.permute.xlu0 %1146
    %1148 = vrot.lane.b32.xlu0 %v55, 15
    %v1149 = vpop.permute.xlu0 %1148
    %vm1150 = vcmp.lt.s32.totalorder %v1058, 15
    %v1151 = vsel %vm1150, %v1135, %v1143
    %v1152 = vsel %vm1150, %v1137, %v1145
    %v1153 = vsel %vm1150, %v1139, %v1147
    %v1154 = vsel %vm1150, %v1141, %v1149
    %v1155 = vsel %vm1150, %v1143, %v1135
    %v1156 = vsel %vm1150, %v1145, %v1137
    %v1157 = vsel %vm1150, %v1147, %v1139
    %v1158 = vsel %vm1150, %v1149, %v1141
    %s1159 = scalar_lea.vmem %s12, 2
    %v1160 = vld [vmem:[%s1159] ss:$8 sm:$0x3]
    %v1162 = vlaneseq
    %v1163 = vshrl.u32 %v1162, 7
    %v1164 = vsub.s32 0, %v1163
    %v1165 = vrot.slane %v1160, %v1164
    %v1166 = vlaneseq
    %v1167 = vshrl.u32 %v1166, 7
    %v1168 = vsub.s32 1, %v1167
    %v1169 = vrot.slane %v1160, %v1168
    %v1172 = vmul.f32 %v1155, %v1165
    %v1173 = vmul.f32 %v1151, %v1169
    %v1174 = vmul.f32 %v1156, %v1165
    %v1175 = vmul.f32 %v1152, %v1169
    %v1176 = vmul.f32 %v1157, %v1165
    %v1177 = vmul.f32 %v1153, %v1169
    %v1178 = vmul.f32 %v1158, %v1165
    %v1179 = vmul.f32 %v1154, %v1169
    %1180 = vrot.lane.b32.xlu0 %v48, 1
    %v1181 = vpop.permute.xlu0 %1180
    %1182 = vrot.lane.b32.xlu0 %v50, 1
    %v1183 = vpop.permute.xlu0 %1182
    %1184 = vrot.lane.b32.xlu0 %v52, 1
    %v1185 = vpop.permute.xlu0 %1184
    %1186 = vrot.lane.b32.xlu0 %v54, 1
    %v1187 = vpop.permute.xlu0 %1186
    %1188 = vrot.lane.b32.xlu0 %v49, 1
    %v1189 = vpop.permute.xlu0 %1188
    %1190 = vrot.lane.b32.xlu0 %v51, 1
    %v1191 = vpop.permute.xlu0 %1190
    %1192 = vrot.lane.b32.xlu0 %v53, 1
    %v1193 = vpop.permute.xlu0 %1192
    %1194 = vrot.lane.b32.xlu0 %v55, 1
    %v1195 = vpop.permute.xlu0 %1194
    %vm1196 = vcmp.lt.s32.totalorder %v1058, 1
    %v1197 = vsel %vm1196, %v1181, %v1189
    %v1198 = vsel %vm1196, %v1183, %v1191
    %v1199 = vsel %vm1196, %v1185, %v1193
    %v1200 = vsel %vm1196, %v1187, %v1195
    %v1201 = vsel %vm1196, %v1189, %v1181
    %v1202 = vsel %vm1196, %v1191, %v1183
    %v1203 = vsel %vm1196, %v1193, %v1185
    %v1204 = vsel %vm1196, %v1195, %v1187
    %s1205 = scalar_lea.vmem %s12, 3
    %v1206 = vld [vmem:[%s1205] ss:$8 sm:$0x3]
    %v1208 = vlaneseq
    %v1209 = vshrl.u32 %v1208, 7
    %v1210 = vsub.s32 0, %v1209
    %v1211 = vrot.slane %v1206, %v1210
    %v1212 = vlaneseq
    %v1213 = vshrl.u32 %v1212, 7
    %v1214 = vsub.s32 1, %v1213
    %v1215 = vrot.slane %v1206, %v1214
    %v1218 = vmul.f32 %v1201, %v1211
    %v1219 = vmul.f32 %v1197, %v1215
    %v1220 = vmul.f32 %v1202, %v1211
    %v1221 = vmul.f32 %v1198, %v1215
    %v1222 = vmul.f32 %v1203, %v1211
    %v1223 = vmul.f32 %v1199, %v1215
    %v1224 = vmul.f32 %v1204, %v1211
    %v1225 = vmul.f32 %v1200, %v1215
    %s1226 = scalar_lea.vmem %s12, 4
    %v1227 = vld [vmem:[%s1226] ss:$8 sm:$0x3]
    %v1229 = vlaneseq
    %v1230 = vshrl.u32 %v1229, 7
    %v1231 = vsub.s32 0, %v1230
    %v1232 = vrot.slane %v1227, %v1231
    %v1233 = vlaneseq
    %v1234 = vshrl.u32 %v1233, 7
    %v1235 = vsub.s32 1, %v1234
    %v1236 = vrot.slane %v1227, %v1235
    %v1239 = vmul.f32 %v48, %v1232
    %v1240 = vmul.f32 %v49, %v1236
    %v1241 = vmul.f32 %v50, %v1232
    %v1242 = vmul.f32 %v51, %v1236
    %v1243 = vmul.f32 %v52, %v1232
    %v1244 = vmul.f32 %v53, %v1236
    %v1245 = vmul.f32 %v54, %v1232
    %v1246 = vmul.f32 %v55, %v1236
    %1247 = vrot.lane.b32.xlu0 %v48, 127
    %v1248 = vpop.permute.xlu0 %1247
    %1249 = vrot.lane.b32.xlu0 %v50, 127
    %v1250 = vpop.permute.xlu0 %1249
    %1251 = vrot.lane.b32.xlu0 %v52, 127
    %v1252 = vpop.permute.xlu0 %1251
    %1253 = vrot.lane.b32.xlu0 %v54, 127
    %v1254 = vpop.permute.xlu0 %1253
    %1255 = vrot.lane.b32.xlu0 %v49, 127
    %v1256 = vpop.permute.xlu0 %1255
    %1257 = vrot.lane.b32.xlu0 %v51, 127
    %v1258 = vpop.permute.xlu0 %1257
    %1259 = vrot.lane.b32.xlu0 %v53, 127
    %v1260 = vpop.permute.xlu0 %1259
    %1261 = vrot.lane.b32.xlu0 %v55, 127
    %v1262 = vpop.permute.xlu0 %1261
    %vm1263 = vcmp.lt.s32.totalorder %v1058, 127
    %v1264 = vsel %vm1263, %v1248, %v1256
    %v1265 = vsel %vm1263, %v1250, %v1258
    %v1266 = vsel %vm1263, %v1252, %v1260
    %v1267 = vsel %vm1263, %v1254, %v1262
    %v1268 = vsel %vm1263, %v1256, %v1248
    %v1269 = vsel %vm1263, %v1258, %v1250
    %v1270 = vsel %vm1263, %v1260, %v1252
    %v1271 = vsel %vm1263, %v1262, %v1254
    %s1272 = scalar_lea.vmem %s12, 5
    %v1273 = vld [vmem:[%s1272] ss:$8 sm:$0x3]
    %v1275 = vlaneseq
    %v1276 = vshrl.u32 %v1275, 7
    %v1277 = vsub.s32 0, %v1276
    %v1278 = vrot.slane %v1273, %v1277
    %v1279 = vlaneseq
    %v1280 = vshrl.u32 %v1279, 7
    %v1281 = vsub.s32 1, %v1280
    %v1282 = vrot.slane %v1273, %v1281
    %v1285 = vmul.f32 %v1264, %v1278
    %v1286 = vmul.f32 %v1268, %v1282
    %v1287 = vmul.f32 %v1265, %v1278
    %v1288 = vmul.f32 %v1269, %v1282
    %v1289 = vmul.f32 %v1266, %v1278
    %v1290 = vmul.f32 %v1270, %v1282
    %v1291 = vmul.f32 %v1267, %v1278
    %v1292 = vmul.f32 %v1271, %v1282
    %1293 = vrot.lane.b32.xlu0 %v48, 113
    %v1294 = vpop.permute.xlu0 %1293
    %1295 = vrot.lane.b32.xlu0 %v50, 113
    %v1296 = vpop.permute.xlu0 %1295
    %1297 = vrot.lane.b32.xlu0 %v52, 113
    %v1298 = vpop.permute.xlu0 %1297
    %1299 = vrot.lane.b32.xlu0 %v54, 113
    %v1300 = vpop.permute.xlu0 %1299
    %1301 = vrot.lane.b32.xlu0 %v49, 113
    %v1302 = vpop.permute.xlu0 %1301
    %1303 = vrot.lane.b32.xlu0 %v51, 113
    %v1304 = vpop.permute.xlu0 %1303
    %1305 = vrot.lane.b32.xlu0 %v53, 113
    %v1306 = vpop.permute.xlu0 %1305
    %1307 = vrot.lane.b32.xlu0 %v55, 113
    %v1308 = vpop.permute.xlu0 %1307
    %vm1309 = vcmp.lt.s32.totalorder %v1058, 113
    %v1310 = vsel %vm1309, %v1294, %v1302
    %v1311 = vsel %vm1309, %v1296, %v1304
    %v1312 = vsel %vm1309, %v1298, %v1306
    %v1313 = vsel %vm1309, %v1300, %v1308
    %v1314 = vsel %vm1309, %v1302, %v1294
    %v1315 = vsel %vm1309, %v1304, %v1296
    %v1316 = vsel %vm1309, %v1306, %v1298
    %v1317 = vsel %vm1309, %v1308, %v1300
    %s1318 = scalar_lea.vmem %s12, 6
    %v1319 = vld [vmem:[%s1318] ss:$8 sm:$0x3]
    %v1321 = vlaneseq
    %v1322 = vshrl.u32 %v1321, 7
    %v1323 = vsub.s32 0, %v1322
    %v1324 = vrot.slane %v1319, %v1323
    %v1325 = vlaneseq
    %v1326 = vshrl.u32 %v1325, 7
    %v1327 = vsub.s32 1, %v1326
    %v1328 = vrot.slane %v1319, %v1327
    %v1331 = vmul.f32 %v1310, %v1324
    %v1332 = vmul.f32 %v1314, %v1328
    %v1333 = vmul.f32 %v1311, %v1324
    %v1334 = vmul.f32 %v1315, %v1328
    %v1335 = vmul.f32 %v1312, %v1324
    %v1336 = vmul.f32 %v1316, %v1328
    %v1337 = vmul.f32 %v1313, %v1324
    %v1338 = vmul.f32 %v1317, %v1328
    %1339 = vrot.lane.b32.xlu0 %v48, 112
    %v1340 = vpop.permute.xlu0 %1339
    %1341 = vrot.lane.b32.xlu0 %v50, 112
    %v1342 = vpop.permute.xlu0 %1341
    %1343 = vrot.lane.b32.xlu0 %v52, 112
    %v1344 = vpop.permute.xlu0 %1343
    %1345 = vrot.lane.b32.xlu0 %v54, 112
    %v1346 = vpop.permute.xlu0 %1345
    %1347 = vrot.lane.b32.xlu0 %v49, 112
    %v1348 = vpop.permute.xlu0 %1347
    %1349 = vrot.lane.b32.xlu0 %v51, 112
    %v1350 = vpop.permute.xlu0 %1349
    %1351 = vrot.lane.b32.xlu0 %v53, 112
    %v1352 = vpop.permute.xlu0 %1351
    %1353 = vrot.lane.b32.xlu0 %v55, 112
    %v1354 = vpop.permute.xlu0 %1353
    %vm1355 = vcmp.lt.s32.totalorder %v1058, 112
    %v1356 = vsel %vm1355, %v1340, %v1348
    %v1357 = vsel %vm1355, %v1342, %v1350
    %v1358 = vsel %vm1355, %v1344, %v1352
    %v1359 = vsel %vm1355, %v1346, %v1354
    %v1360 = vsel %vm1355, %v1348, %v1340
    %v1361 = vsel %vm1355, %v1350, %v1342
    %v1362 = vsel %vm1355, %v1352, %v1344
    %v1363 = vsel %vm1355, %v1354, %v1346
    %s1364 = scalar_lea.vmem %s12, 7
    %v1365 = vld [vmem:[%s1364] ss:$8 sm:$0x3]
    %v1367 = vlaneseq
    %v1368 = vshrl.u32 %v1367, 7
    %v1369 = vsub.s32 0, %v1368
    %v1370 = vrot.slane %v1365, %v1369
    %v1371 = vlaneseq
    %v1372 = vshrl.u32 %v1371, 7
    %v1373 = vsub.s32 1, %v1372
    %v1374 = vrot.slane %v1365, %v1373
    %v1377 = vmul.f32 %v1356, %v1370
    %v1378 = vmul.f32 %v1360, %v1374
    %v1379 = vmul.f32 %v1357, %v1370
    %v1380 = vmul.f32 %v1361, %v1374
    %v1381 = vmul.f32 %v1358, %v1370
    %v1382 = vmul.f32 %v1362, %v1374
    %v1383 = vmul.f32 %v1359, %v1370
    %v1384 = vmul.f32 %v1363, %v1374
    %1385 = vrot.lane.b32.xlu0 %v48, 111
    %v1386 = vpop.permute.xlu0 %1385
    %1387 = vrot.lane.b32.xlu0 %v50, 111
    %v1388 = vpop.permute.xlu0 %1387
    %1389 = vrot.lane.b32.xlu0 %v52, 111
    %v1390 = vpop.permute.xlu0 %1389
    %1391 = vrot.lane.b32.xlu0 %v54, 111
    %v1392 = vpop.permute.xlu0 %1391
    %1393 = vrot.lane.b32.xlu0 %v49, 111
    %v1394 = vpop.permute.xlu0 %1393
    %1395 = vrot.lane.b32.xlu0 %v51, 111
    %v1396 = vpop.permute.xlu0 %1395
    %1397 = vrot.lane.b32.xlu0 %v53, 111
    %v1398 = vpop.permute.xlu0 %1397
    %1399 = vrot.lane.b32.xlu0 %v55, 111
    %v1400 = vpop.permute.xlu0 %1399
    %vm1401 = vcmp.lt.s32.totalorder %v1058, 111
    %v1402 = vsel %vm1401, %v1386, %v1394
    %v1403 = vsel %vm1401, %v1388, %v1396
    %v1404 = vsel %vm1401, %v1390, %v1398
    %v1405 = vsel %vm1401, %v1392, %v1400
    %v1406 = vsel %vm1401, %v1394, %v1386
    %v1407 = vsel %vm1401, %v1396, %v1388
    %v1408 = vsel %vm1401, %v1398, %v1390
    %v1409 = vsel %vm1401, %v1400, %v1392
    %s1410 = scalar_lea.vmem %s12, 16
    %v1411 = vld [vmem:[%s1410] ss:$8 sm:$0x3]
    %v1413 = vlaneseq
    %v1414 = vshrl.u32 %v1413, 7
    %v1415 = vsub.s32 0, %v1414
    %v1416 = vrot.slane %v1411, %v1415
    %v1417 = vlaneseq
    %v1418 = vshrl.u32 %v1417, 7
    %v1419 = vsub.s32 1, %v1418
    %v1420 = vrot.slane %v1411, %v1419
    %v1423 = vmul.f32 %v1402, %v1416
    %v1424 = vmul.f32 %v1406, %v1420
    %v1425 = vmul.f32 %v1403, %v1416
    %v1426 = vmul.f32 %v1407, %v1420
    %v1427 = vmul.f32 %v1404, %v1416
    %v1428 = vmul.f32 %v1408, %v1420
    %v1429 = vmul.f32 %v1405, %v1416
    %v1430 = vmul.f32 %v1409, %v1420
    %v1431 = vld [vmem:[%s3] sm:$0xff]
    %v1432 = vld [vmem:[%s3 + $0x8] sm:$0xff]
    %v1433 = vld [vmem:[%s3 + $0x10] sm:$0xff]
    %v1434 = vld [vmem:[%s3 + $0x18] sm:$0xff]
    %v1435 = vld [vmem:[%s3 + $0x20] sm:$0xff]
    %v1436 = vld [vmem:[%s3 + $0x28] sm:$0xff]
    %v1437 = vld [vmem:[%s3 + $0x30] sm:$0xff]
    %v1438 = vld [vmem:[%s3 + $0x38] sm:$0xff]
    %v1439 = vld [vmem:[%s3 + $0x40] sm:$0xff]
    %v1440 = vld [vmem:[%s3 + $0x48] sm:$0xff]
    %v1441 = vld [vmem:[%s3 + $0x50] sm:$0xff]
    %v1442 = vld [vmem:[%s3 + $0x58] sm:$0xff]
    %v1443 = vld [vmem:[%s4] sm:$0xff]
    %v1444 = vld [vmem:[%s4 + $0x8] sm:$0xff]
    %v1445 = vld [vmem:[%s4 + $0x10] sm:$0xff]
    %v1446 = vld [vmem:[%s4 + $0x18] sm:$0xff]
    %1448 = vset.pattern.permute.xlu0 0
    %1449 = vperm.xlu0 %1448, %v1443
    %v1450 = vpop.permute.xlu0 %1449
    %1453 = vset.pattern.permute.xlu0 0
    %1454 = vperm.xlu0 %1453, %v1444
    %v1455 = vpop.permute.xlu0 %1454
    %1458 = vset.pattern.permute.xlu0 0
    %1459 = vperm.xlu0 %1458, %v1445
    %v1460 = vpop.permute.xlu0 %1459
    %1463 = vset.pattern.permute.xlu0 0
    %1464 = vperm.xlu0 %1463, %v1446
    %v1465 = vpop.permute.xlu0 %1464
    %v1468 = vsel %vm233, %v1433, 0
    %v1471 = vsel %vm233, %v1436, 0
    %v1474 = vsel %vm233, %v1439, 0
    %v1477 = vsel %vm233, %v1442, 0
    %1479 = vmatprep.subr.mxu0 %v1081
    %1480 = vmatpush1.msra.mxu0 %v1080
    %1481 = vmatprep.subr.mxu0 %v1083
    %1482 = vmatpush1.msra.mxu0 %v1082
    %1483 = vmatprep.subr.mxu0 %v1085
    %1484 = vmatpush1.msra.mxu0 %v1084
    %1485 = vmatprep.subr.mxu0 %v1087
    %1486 = vmatpush1.msra.mxu0 %v1086
    %1487 = vmatprep.subr.mxu0 %v1127
    %1488 = vmatpush1.msra.mxu0 %v1126
    %1489 = vmatprep.subr.mxu0 %v1129
    %1490 = vmatpush1.msra.mxu0 %v1128
    %1491 = vmatprep.subr.mxu0 %v1131
    %1492 = vmatpush1.msra.mxu0 %v1130
    %1493 = vmatprep.subr.mxu0 %v1133
    %1494 = vmatpush1.msra.mxu0 %v1132
    %1495 = vmatprep.subr.mxu0 %v1173
    %1496 = vmatpush1.msra.mxu0 %v1172
    %1497 = vmatprep.subr.mxu0 %v1175
    %1498 = vmatpush1.msra.mxu0 %v1174
    %1499 = vmatprep.subr.mxu0 %v1177
    %1500 = vmatpush1.msra.mxu0 %v1176
    %1501 = vmatprep.subr.mxu0 %v1179
    %1502 = vmatpush1.msra.mxu0 %v1178
    %1503 = vmatprep.subr.mxu0 %v1219
    %1504 = vmatpush1.msra.mxu0 %v1218
    %1505 = vmatprep.subr.mxu0 %v1221
    %1506 = vmatpush1.msra.mxu0 %v1220
    %1507 = vmatprep.subr.mxu0 %v1223
    %1508 = vmatpush1.msra.mxu0 %v1222
    %1509 = vmatprep.subr.mxu0 %v1225
    %1510 = vmatpush1.msra.mxu0 %v1224
    %1511 = vmatprep.subr.mxu0 %v1240
    %1512 = vmatpush1.msra.mxu0 %v1239
    %1513 = vmatprep.subr.mxu0 %v1242
    %1514 = vmatpush1.msra.mxu0 %v1241
    %1515 = vmatprep.subr.mxu0 %v1244
    %1516 = vmatpush1.msra.mxu0 %v1243
    %1517 = vmatprep.subr.mxu0 %v1246
    %1518 = vmatpush1.msra.mxu0 %v1245
    %1519 = vmatprep.subr.mxu0 %v1286
    %1520 = vmatpush1.msra.mxu0 %v1285
    %1521 = vmatprep.subr.mxu0 %v1288
    %1522 = vmatpush1.msra.mxu0 %v1287
    %1523 = vmatprep.subr.mxu0 %v1290
    %1524 = vmatpush1.msra.mxu0 %v1289
    %1525 = vmatprep.subr.mxu0 %v1292
    %1526 = vmatpush1.msra.mxu0 %v1291
    %1527 = vmatprep.subr.mxu0 %v1332
    %1528 = vmatpush1.msra.mxu0 %v1331
    %1529 = vmatprep.subr.mxu0 %v1334
    %1530 = vmatpush1.msra.mxu0 %v1333
    %1531 = vmatprep.subr.mxu0 %v1336
    %1532 = vmatpush1.msra.mxu0 %v1335
    %1533 = vmatprep.subr.mxu0 %v1338
    %1534 = vmatpush1.msra.mxu0 %v1337
    %1535 = vmatprep.subr.mxu0 %v1378
    %1536 = vmatpush1.msra.mxu0 %v1377
    %1537 = vmatprep.subr.mxu0 %v1380
    %1538 = vmatpush1.msra.mxu0 %v1379
    %1539 = vmatprep.subr.mxu0 %v1382
    %1540 = vmatpush1.msra.mxu0 %v1381
    %1541 = vmatprep.subr.mxu0 %v1384
    %1542 = vmatpush1.msra.mxu0 %v1383
    %1543 = vmatprep.mubr.f32.mxu0 %v1432
    %1544 = vmatmul.mubr.f32.gmra.mrb[0].mxu0 %v1431
    %v1545 = vpop.f32.mrb[0].mxu0
    %v1546 = vadd.f32 %v1450, %v1545
    %v1547 = vpop.f32.mrb[0].mxu0
    %v1548 = vadd.f32 %v1450, %v1547
    %1549 = vmatprep.mubr.f32.mxu0 %v1435
    %1550 = vmatmul.mubr.f32.gmra.mrb[0].mxu0 %v1434
    %v1551 = vpop.f32.mrb[0].mxu0
    %v1552 = vadd.f32 %v1455, %v1551
    %v1553 = vpop.f32.mrb[0].mxu0
    %v1554 = vadd.f32 %v1455, %v1553
    %1555 = vmatprep.mubr.f32.mxu0 %v1438
    %1556 = vmatmul.mubr.f32.gmra.mrb[0].mxu0 %v1437
    %v1557 = vpop.f32.mrb[0].mxu0
    %v1558 = vadd.f32 %v1460, %v1557
    %v1559 = vpop.f32.mrb[0].mxu0
    %v1560 = vadd.f32 %v1460, %v1559
    %1561 = vmatprep.mubr.f32.mxu0 %v1441
    %1562 = vmatmul.mubr.f32.gmra.mrb[0].mxu0 %v1440
    %v1563 = vpop.f32.mrb[0].mxu0
    %v1564 = vadd.f32 %v1465, %v1563
    %v1565 = vpop.f32.mrb[0].mxu0
    %v1566 = vadd.f32 %v1465, %v1565
    %1567 = vdwg.mxu0
    %1568 = vmatprep.subr.mxu0 %v1424
    %1569 = vmatpush1.msra.mxu0 %v1423
    %1570 = vmatprep.subr.mxu0 %v1426
    %1571 = vmatpush1.msra.mxu0 %v1425
    %1572 = vmatprep.subr.mxu0 %v1428
    %1573 = vmatpush1.msra.mxu0 %v1427
    %1574 = vmatprep.subr.mxu0 %v1430
    %1575 = vmatpush1.msra.mxu0 %v1429
    %1576 = vmatprep.subr.mxu0 0.0
    %1577 = vmatpush1.msra.mxu0 0.0
    %1578 = vmatprep.subr.mxu0 0.0
    %1579 = vmatpush1.msra.mxu0 0.0
    %1580 = vmatprep.subr.mxu0 0.0
    %1581 = vmatpush1.msra.mxu0 0.0
    %1582 = vmatprep.subr.mxu0 0.0
    %1583 = vmatpush1.msra.mxu0 0.0
    %1584 = vmatprep.subr.mxu0 0.0
    %1585 = vmatpush1.msra.mxu0 0.0
    %1586 = vmatprep.subr.mxu0 0.0
    %1587 = vmatpush1.msra.mxu0 0.0
    %1588 = vmatprep.subr.mxu0 0.0
    %1589 = vmatpush1.msra.mxu0 0.0
    %1590 = vmatprep.subr.mxu0 0.0
    %1591 = vmatpush1.msra.mxu0 0.0
    %1592 = vmatprep.subr.mxu0 0.0
    %1593 = vmatpush1.msra.mxu0 0.0
    %1594 = vmatprep.subr.mxu0 0.0
    %1595 = vmatpush1.msra.mxu0 0.0
    %1596 = vmatprep.subr.mxu0 0.0
    %1597 = vmatpush1.msra.mxu0 0.0
    %1598 = vmatprep.subr.mxu0 0.0
    %1599 = vmatpush1.msra.mxu0 0.0
    %1600 = vmatprep.subr.mxu0 0.0
    %1601 = vmatpush1.msra.mxu0 0.0
    %1602 = vmatprep.subr.mxu0 0.0
    %1603 = vmatpush1.msra.mxu0 0.0
    %1604 = vmatprep.subr.mxu0 0.0
    %1605 = vmatpush1.msra.mxu0 0.0
    %1606 = vmatprep.subr.mxu0 0.0
    %1607 = vmatpush1.msra.mxu0 0.0
    %1608 = vmatprep.subr.mxu0 0.0
    %1609 = vmatpush1.msra.mxu0 0.0
    %1610 = vmatprep.subr.mxu0 0.0
    %1611 = vmatpush1.msra.mxu0 0.0
    %1612 = vmatprep.subr.mxu0 0.0
    %1613 = vmatpush1.msra.mxu0 0.0
    %1614 = vmatprep.subr.mxu0 0.0
    %1615 = vmatpush1.msra.mxu0 0.0
    %1616 = vmatprep.subr.mxu0 0.0
    %1617 = vmatpush1.msra.mxu0 0.0
    %1618 = vmatprep.subr.mxu0 0.0
    %1619 = vmatpush1.msra.mxu0 0.0
    %1620 = vmatprep.subr.mxu0 0.0
    %1621 = vmatpush1.msra.mxu0 0.0
    %1622 = vmatprep.subr.mxu0 0.0
    %1623 = vmatpush1.msra.mxu0 0.0
    %1624 = vmatprep.subr.mxu0 0.0
    %1625 = vmatpush1.msra.mxu0 0.0
    %1626 = vmatprep.subr.mxu0 0.0
    %1627 = vmatpush1.msra.mxu0 0.0
    %1628 = vmatprep.subr.mxu0 0.0
    %1629 = vmatpush1.msra.mxu0 0.0
    %1630 = vmatprep.subr.mxu0 0.0
    %1631 = vmatpush1.msra.mxu0 0.0
    %1632 = vmatprep.mubr.f32.mxu0 0.0
    %1633 = vmatmul.mubr.f32.gmra.mrb[0].mxu0 %v1468
    %v1634 = vpop.f32.mrb[0].mxu0
    %v1635 = vadd.f32 %v1546, %v1634
    %v1636 = vpop.f32.mrb[0].mxu0
    %v1637 = vadd.f32 %v1548, %v1636
    %1638 = vmatprep.mubr.f32.mxu0 0.0
    %1639 = vmatmul.mubr.f32.gmra.mrb[0].mxu0 %v1471
    %v1640 = vpop.f32.mrb[0].mxu0
    %v1641 = vadd.f32 %v1552, %v1640
    %v1642 = vpop.f32.mrb[0].mxu0
    %v1643 = vadd.f32 %v1554, %v1642
    %1644 = vmatprep.mubr.f32.mxu0 0.0
    %1645 = vmatmul.mubr.f32.gmra.mrb[0].mxu0 %v1474
    %v1646 = vpop.f32.mrb[0].mxu0
    %v1647 = vadd.f32 %v1558, %v1646
    %v1648 = vpop.f32.mrb[0].mxu0
    %v1649 = vadd.f32 %v1560, %v1648
    %1650 = vmatprep.mubr.f32.mxu0 0.0
    %1651 = vmatmul.mubr.f32.gmra.mrb[0].mxu0 %v1477
    %v1652 = vpop.f32.mrb[0].mxu0
    %v1653 = vadd.f32 %v1564, %v1652
    %v1654 = vpop.f32.mrb[0].mxu0
    %v1655 = vadd.f32 %v1566, %v1654
    %1656 = vdwg.mxu0
    %1657 = vmatprep.subr.mxu0 0.0
    %1658 = vmatpush1.msra.mxu0 %v56
    %1659 = vmatprep.subr.mxu0 0.0
    %1660 = vmatpush1.msra.mxu0 %v57
    %1661 = vmatprep.subr.mxu0 0.0
    %1662 = vmatpush1.msra.mxu0 %v58
    %1663 = vmatprep.subr.mxu0 0.0
    %1664 = vmatpush1.msra.mxu0 %v59
    %1665 = vmatprep.subr.mxu0 0.0
    %1666 = vmatpush1.msra.mxu0 %v60
    %1667 = vmatprep.subr.mxu0 0.0
    %1668 = vmatpush1.msra.mxu0 %v61
    %1669 = vmatprep.subr.mxu0 0.0
    %1670 = vmatpush1.msra.mxu0 %v62
    %1671 = vmatprep.subr.mxu0 0.0
    %1672 = vmatpush1.msra.mxu0 %v63
    %1673 = vmatprep.subr.mxu0 0.0
    %1674 = vmatpush1.msra.mxu0 %v64
    %1675 = vmatprep.subr.mxu0 0.0
    %1676 = vmatpush1.msra.mxu0 %v65
    %1677 = vmatprep.subr.mxu0 0.0
    %1678 = vmatpush1.msra.mxu0 %v66
    %1679 = vmatprep.subr.mxu0 0.0
    %1680 = vmatpush1.msra.mxu0 %v67
    %1681 = vmatprep.subr.mxu0 0.0
    %1682 = vmatpush1.msra.mxu0 %v68
    %1683 = vmatprep.subr.mxu0 0.0
    %1684 = vmatpush1.msra.mxu0 %v69
    %1685 = vmatprep.subr.mxu0 0.0
    %1686 = vmatpush1.msra.mxu0 %v70
    %1687 = vmatprep.subr.mxu0 0.0
    %1688 = vmatpush1.msra.mxu0 %v71
    %1689 = vmatprep.subr.mxu0 0.0
    %1690 = vmatpush1.msra.mxu0 %v72
    %1691 = vmatprep.subr.mxu0 0.0
    %1692 = vmatpush1.msra.mxu0 %v73
    %1693 = vmatprep.subr.mxu0 0.0
    %1694 = vmatpush1.msra.mxu0 %v74
    %1695 = vmatprep.subr.mxu0 0.0
    %1696 = vmatpush1.msra.mxu0 %v75
    %1697 = vmatprep.subr.mxu0 0.0
    %1698 = vmatpush1.msra.mxu0 %v76
    %1699 = vmatprep.subr.mxu0 0.0
    %1700 = vmatpush1.msra.mxu0 %v77
    %1701 = vmatprep.subr.mxu0 0.0
    %1702 = vmatpush1.msra.mxu0 %v78
    %1703 = vmatprep.subr.mxu0 0.0
    %1704 = vmatpush1.msra.mxu0 %v79
    %1705 = vmatprep.subr.mxu0 0.0
    %1706 = vmatpush1.msra.mxu0 %v80
    %1707 = vmatprep.subr.mxu0 0.0
    %1708 = vmatpush1.msra.mxu0 %v81
    %1709 = vmatprep.subr.mxu0 0.0
    %1710 = vmatpush1.msra.mxu0 %v82
    %1711 = vmatprep.subr.mxu0 0.0
    %1712 = vmatpush1.msra.mxu0 %v83
    %1713 = vmatprep.subr.mxu0 0.0
    %1714 = vmatpush1.msra.mxu0 %v84
    %1715 = vmatprep.subr.mxu0 0.0
    %1716 = vmatpush1.msra.mxu0 %v85
    %1717 = vmatprep.subr.mxu0 0.0
    %1718 = vmatpush1.msra.mxu0 %v86
    %1719 = vmatprep.subr.mxu0 0.0
    %1720 = vmatpush1.msra.mxu0 %v87
    %1721 = vmatprep.mubr.f32.mxu0 %v1034
    %1722 = vmatmul.mubr.f32.gmra.mrb[0].mxu0 %v1033
    %v1723 = vpop.f32.mrb[0].mxu0
    %v1724 = vadd.f32 0.0, %v1723
    %v1725 = vpop.f32.mrb[0].mxu0
    %1726 = vmatprep.mubr.f32.mxu0 %v1036
    %1727 = vmatmul.mubr.f32.gmra.mrb[0].mxu0 %v1035
    %v1728 = vpop.f32.mrb[0].mxu0
    %v1729 = vadd.f32 0.0, %v1728
    %v1730 = vpop.f32.mrb[0].mxu0
    %1731 = vmatprep.mubr.f32.mxu0 %v1038
    %1732 = vmatmul.mubr.f32.gmra.mrb[0].mxu0 %v1037
    %v1733 = vpop.f32.mrb[0].mxu0
    %v1734 = vadd.f32 0.0, %v1733
    %v1735 = vpop.f32.mrb[0].mxu0
    %1736 = vmatprep.mubr.f32.mxu0 %v1040
    %1737 = vmatmul.mubr.f32.gmra.mrb[0].mxu0 %v1039
    %v1738 = vpop.f32.mrb[0].mxu0
    %v1739 = vadd.f32 0.0, %v1738
    %v1740 = vpop.f32.mrb[0].mxu0
    %1741 = vdwg.mxu0
    %v1742 = vmul.f32 %v1724, 0.00390625
    %v1743 = vmul.f32 %v1729, 0.00390625
    %v1744 = vmul.f32 %v1734, 0.00390625
    %v1745 = vmul.f32 %v1739, 0.00390625
    %1746 = vmatprep.subr.mxu0 0.0
    %1747 = vmatpush1.msra.mxu0 %v56
    %1748 = vmatprep.subr.mxu0 0.0
    %1749 = vmatpush1.msra.mxu0 %v57
    %1750 = vmatprep.subr.mxu0 0.0
    %1751 = vmatpush1.msra.mxu0 %v58
    %1752 = vmatprep.subr.mxu0 0.0
    %1753 = vmatpush1.msra.mxu0 %v59
    %1754 = vmatprep.subr.mxu0 0.0
    %1755 = vmatpush1.msra.mxu0 %v60
    %1756 = vmatprep.subr.mxu0 0.0
    %1757 = vmatpush1.msra.mxu0 %v61
    %1758 = vmatprep.subr.mxu0 0.0
    %1759 = vmatpush1.msra.mxu0 %v62
    %1760 = vmatprep.subr.mxu0 0.0
    %1761 = vmatpush1.msra.mxu0 %v63
    %1762 = vmatprep.subr.mxu0 0.0
    %1763 = vmatpush1.msra.mxu0 %v64
    %1764 = vmatprep.subr.mxu0 0.0
    %1765 = vmatpush1.msra.mxu0 %v65
    %1766 = vmatprep.subr.mxu0 0.0
    %1767 = vmatpush1.msra.mxu0 %v66
    %1768 = vmatprep.subr.mxu0 0.0
    %1769 = vmatpush1.msra.mxu0 %v67
    %1770 = vmatprep.subr.mxu0 0.0
    %1771 = vmatpush1.msra.mxu0 %v68
    %1772 = vmatprep.subr.mxu0 0.0
    %1773 = vmatpush1.msra.mxu0 %v69
    %1774 = vmatprep.subr.mxu0 0.0
    %1775 = vmatpush1.msra.mxu0 %v70
    %1776 = vmatprep.subr.mxu0 0.0
    %1777 = vmatpush1.msra.mxu0 %v71
    %1778 = vmatprep.subr.mxu0 0.0
    %1779 = vmatpush1.msra.mxu0 %v72
    %1780 = vmatprep.subr.mxu0 0.0
    %1781 = vmatpush1.msra.mxu0 %v73
    %1782 = vmatprep.subr.mxu0 0.0
    %1783 = vmatpush1.msra.mxu0 %v74
    %1784 = vmatprep.subr.mxu0 0.0
    %1785 = vmatpush1.msra.mxu0 %v75
    %1786 = vmatprep.subr.mxu0 0.0
    %1787 = vmatpush1.msra.mxu0 %v76
    %1788 = vmatprep.subr.mxu0 0.0
    %1789 = vmatpush1.msra.mxu0 %v77
    %1790 = vmatprep.subr.mxu0 0.0
    %1791 = vmatpush1.msra.mxu0 %v78
    %1792 = vmatprep.subr.mxu0 0.0
    %1793 = vmatpush1.msra.mxu0 %v79
    %1794 = vmatprep.subr.mxu0 0.0
    %1795 = vmatpush1.msra.mxu0 %v80
    %1796 = vmatprep.subr.mxu0 0.0
    %1797 = vmatpush1.msra.mxu0 %v81
    %1798 = vmatprep.subr.mxu0 0.0
    %1799 = vmatpush1.msra.mxu0 %v82
    %1800 = vmatprep.subr.mxu0 0.0
    %1801 = vmatpush1.msra.mxu0 %v83
    %1802 = vmatprep.subr.mxu0 0.0
    %1803 = vmatpush1.msra.mxu0 %v84
    %1804 = vmatprep.subr.mxu0 0.0
    %1805 = vmatpush1.msra.mxu0 %v85
    %1806 = vmatprep.subr.mxu0 0.0
    %1807 = vmatpush1.msra.mxu0 %v86
    %1808 = vmatprep.subr.mxu0 0.0
    %1809 = vmatpush1.msra.mxu0 %v87
    %1810 = vmatprep.mubr.f32.mxu0 %v1637
    %1811 = vmatmul.mubr.f32.gmra.mrb[0].mxu0 %v1635
    %v1812 = vpop.f32.mrb[0].mxu0
    %v1813 = vadd.f32 0.0, %v1812
    %v1814 = vpop.f32.mrb[0].mxu0
    %1815 = vmatprep.mubr.f32.mxu0 %v1643
    %1816 = vmatmul.mubr.f32.gmra.mrb[0].mxu0 %v1641
    %v1817 = vpop.f32.mrb[0].mxu0
    %v1818 = vadd.f32 0.0, %v1817
    %v1819 = vpop.f32.mrb[0].mxu0
    %1820 = vmatprep.mubr.f32.mxu0 %v1649
    %1821 = vmatmul.mubr.f32.gmra.mrb[0].mxu0 %v1647
    %v1822 = vpop.f32.mrb[0].mxu0
    %v1823 = vadd.f32 0.0, %v1822
    %v1824 = vpop.f32.mrb[0].mxu0
    %1825 = vmatprep.mubr.f32.mxu0 %v1655
    %1826 = vmatmul.mubr.f32.gmra.mrb[0].mxu0 %v1653
    %v1827 = vpop.f32.mrb[0].mxu0
    %v1828 = vadd.f32 0.0, %v1827
    %v1829 = vpop.f32.mrb[0].mxu0
    %1830 = vdwg.mxu0
    %v1831 = vmul.f32 %v1813, 0.00390625
    %v1832 = vmul.f32 %v1818, 0.00390625
    %v1833 = vmul.f32 %v1823, 0.00390625
    %v1834 = vmul.f32 %v1828, 0.00390625
    %v1835 = vld [vmem:[%s8] sm:$0xff]
    %v1836 = vld [vmem:[%s8 + $0x8] sm:$0xff]
    %v1837 = vld [vmem:[%s8 + $0x10] sm:$0xff]
    %v1838 = vld [vmem:[%s8 + $0x18] sm:$0xff]
    %vm1839 = vcmask 7168
    %v1840 = vsel %vm1839, %v1742, -inf
    %v1841 = vsel %vm1839, %v1743, -inf
    %v1842 = vsel %vm1839, %v1744, -inf
    %v1843 = vsel %vm1839, %v1745, -inf
    %v1844 = vmax.f32 %v1840, %v1841
    %v1845 = vmax.f32 %v1842, %v1843
    %v1846 = vmax.f32 %v1844, %v1845
    %v1847 = vrot.slane %v1846, 4
    %v1848 = vmax.f32 %v1846, %v1847
    %v1849 = vrot.slane %v1848, 2
    %v1850 = vmax.f32 %v1848, %v1849
    %v1851 = vrot.slane %v1850, 1
    %v1852 = vmax.f32 %v1850, %v1851
    %v1853 = vsub.f32 %v1742, %v1852
    %v1854 = vsub.f32 %v1743, %v1852
    %v1855 = vsub.f32 %v1744, %v1852
    %v1856 = vsub.f32 %v1745, %v1852
    %v1857 = vmul.f32 %v1853, 1.442695
    %v1858 = vpow.pop %v1857
    %v1859 = vmul.f32 %v1854, 1.442695
    %v1860 = vpow.pop %v1859
    %v1861 = vmul.f32 %v1855, 1.442695
    %v1862 = vpow.pop %v1861
    %v1863 = vmul.f32 %v1856, 1.442695
    %v1864 = vpow.pop %v1863
    %v1865 = vsel %vm1839, %v1831, -inf
    %v1866 = vsel %vm1839, %v1832, -inf
    %v1867 = vsel %vm1839, %v1833, -inf
    %v1868 = vsel %vm1839, %v1834, -inf
    %v1869 = vmax.f32 %v1865, %v1866
    %v1870 = vmax.f32 %v1867, %v1868
    %v1871 = vmax.f32 %v1869, %v1870
    %v1872 = vrot.slane %v1871, 4
    %v1873 = vmax.f32 %v1871, %v1872
    %v1874 = vrot.slane %v1873, 2
    %v1875 = vmax.f32 %v1873, %v1874
    %v1876 = vrot.slane %v1875, 1
    %v1877 = vmax.f32 %v1875, %v1876
    %v1878 = vsub.f32 %v1831, %v1877
    %v1879 = vsub.f32 %v1832, %v1877
    %v1880 = vsub.f32 %v1833, %v1877
    %v1881 = vsub.f32 %v1834, %v1877
    %v1882 = vmul.f32 %v1878, 1.442695
    %v1883 = vpow.pop %v1882
    %v1884 = vmul.f32 %v1879, 1.442695
    %v1885 = vpow.pop %v1884
    %v1886 = vmul.f32 %v1880, 1.442695
    %v1887 = vpow.pop %v1886
    %v1888 = vmul.f32 %v1881, 1.442695
    %v1889 = vpow.pop %v1888
    %v1891 = vsel %vm233, %v1835, 0
    %v1894 = vsel %vm233, %v1836, 0
    %v1897 = vsel %vm233, %v1837, 0
    %v1900 = vsel %vm233, %v1838, 0
    %1902 = vmatprep.subr.mxu0 0.0
    %1903 = vmatpush1.msra.mxu0 %v1858
    %1904 = vmatprep.subr.mxu0 0.0
    %1905 = vmatpush1.msra.mxu0 %v1860
    %1906 = vmatprep.subr.mxu0 0.0
    %1907 = vmatpush1.msra.mxu0 %v1862
    %1908 = vmatprep.subr.mxu0 0.0
    %1909 = vmatpush1.msra.mxu0 %v1864
    %1910 = vmatprep.subr.mxu0 0.0
    %1911 = vmatpush1.msra.mxu0 0.0
    %1912 = vmatprep.subr.mxu0 0.0
    %1913 = vmatpush1.msra.mxu0 0.0
    %1914 = vmatprep.subr.mxu0 0.0
    %1915 = vmatpush1.msra.mxu0 0.0
    %1916 = vmatprep.subr.mxu0 0.0
    %1917 = vmatpush1.msra.mxu0 0.0
    %1918 = vmatprep.subr.mxu0 0.0
    %1919 = vmatpush1.msra.mxu0 0.0
    %1920 = vmatprep.subr.mxu0 0.0
    %1921 = vmatpush1.msra.mxu0 0.0
    %1922 = vmatprep.subr.mxu0 0.0
    %1923 = vmatpush1.msra.mxu0 0.0
    %1924 = vmatprep.subr.mxu0 0.0
    %1925 = vmatpush1.msra.mxu0 0.0
    %1926 = vmatprep.subr.mxu0 0.0
    %1927 = vmatpush1.msra.mxu0 0.0
    %1928 = vmatprep.subr.mxu0 0.0
    %1929 = vmatpush1.msra.mxu0 0.0
    %1930 = vmatprep.subr.mxu0 0.0
    %1931 = vmatpush1.msra.mxu0 0.0
    %1932 = vmatprep.subr.mxu0 0.0
    %1933 = vmatpush1.msra.mxu0 0.0
    %1934 = vmatprep.subr.mxu0 0.0
    %1935 = vmatpush1.msra.mxu0 0.0
    %1936 = vmatprep.subr.mxu0 0.0
    %1937 = vmatpush1.msra.mxu0 0.0
    %1938 = vmatprep.subr.mxu0 0.0
    %1939 = vmatpush1.msra.mxu0 0.0
    %1940 = vmatprep.subr.mxu0 0.0
    %1941 = vmatpush1.msra.mxu0 0.0
    %1942 = vmatprep.subr.mxu0 0.0
    %1943 = vmatpush1.msra.mxu0 0.0
    %1944 = vmatprep.subr.mxu0 0.0
    %1945 = vmatpush1.msra.mxu0 0.0
    %1946 = vmatprep.subr.mxu0 0.0
    %1947 = vmatpush1.msra.mxu0 0.0
    %1948 = vmatprep.subr.mxu0 0.0
    %1949 = vmatpush1.msra.mxu0 0.0
    %1950 = vmatprep.subr.mxu0 0.0
    %1951 = vmatpush1.msra.mxu0 0.0
    %1952 = vmatprep.subr.mxu0 0.0
    %1953 = vmatpush1.msra.mxu0 0.0
    %1954 = vmatprep.subr.mxu0 0.0
    %1955 = vmatpush1.msra.mxu0 0.0
    %1956 = vmatprep.subr.mxu0 0.0
    %1957 = vmatpush1.msra.mxu0 0.0
    %1958 = vmatprep.subr.mxu0 0.0
    %1959 = vmatpush1.msra.mxu0 0.0
    %1960 = vmatprep.subr.mxu0 0.0
    %1961 = vmatpush1.msra.mxu0 0.0
    %1962 = vmatprep.subr.mxu0 0.0
    %1963 = vmatpush1.msra.mxu0 0.0
    %1964 = vmatprep.subr.mxu0 0.0
    %1965 = vmatpush1.msra.mxu0 0.0
    %1966 = vmatprep.mubr.f32.mxu0 0.0
    %1967 = vmatmul.mubr.f32.gmra.mrb[0].mxu0 %v1891
    %v1968 = vpop.f32.mrb[0].mxu0
    %v1969 = vadd.f32 0.0, %v1968
    %v1970 = vpop.f32.mrb[0].mxu0
    %1971 = vmatprep.mubr.f32.mxu0 0.0
    %1972 = vmatmul.mubr.f32.gmra.mrb[0].mxu0 %v1894
    %v1973 = vpop.f32.mrb[0].mxu0
    %v1974 = vadd.f32 0.0, %v1973
    %v1975 = vpop.f32.mrb[0].mxu0
    %1976 = vmatprep.mubr.f32.mxu0 0.0
    %1977 = vmatmul.mubr.f32.gmra.mrb[0].mxu0 %v1897
    %v1978 = vpop.f32.mrb[0].mxu0
    %v1979 = vadd.f32 0.0, %v1978
    %v1980 = vpop.f32.mrb[0].mxu0
    %1981 = vmatprep.mubr.f32.mxu0 0.0
    %1982 = vmatmul.mubr.f32.gmra.mrb[0].mxu0 %v1900
    %v1983 = vpop.f32.mrb[0].mxu0
    %v1984 = vadd.f32 0.0, %v1983
    %v1985 = vpop.f32.mrb[0].mxu0
    %1986 = vdwg.mxu0
    %v1987 = vrcp.pop %v1969
    %v1988 = vmul.f32 %v1858, %v1987
    %v1989 = vrcp.pop %v1974
    %v1990 = vmul.f32 %v1860, %v1989
    %v1991 = vrcp.pop %v1979
    %v1992 = vmul.f32 %v1862, %v1991
    %v1993 = vrcp.pop %v1984
    %v1994 = vmul.f32 %v1864, %v1993
    %1995 = vmatprep.subr.mxu0 0.0
    %1996 = vmatpush1.msra.mxu0 %v1883
    %1997 = vmatprep.subr.mxu0 0.0
    %1998 = vmatpush1.msra.mxu0 %v1885
    %1999 = vmatprep.subr.mxu0 0.0
    %2000 = vmatpush1.msra.mxu0 %v1887
    %2001 = vmatprep.subr.mxu0 0.0
    %2002 = vmatpush1.msra.mxu0 %v1889
    %2003 = vmatprep.subr.mxu0 0.0
    %2004 = vmatpush1.msra.mxu0 0.0
    %2005 = vmatprep.subr.mxu0 0.0
    %2006 = vmatpush1.msra.mxu0 0.0
    %2007 = vmatprep.subr.mxu0 0.0
    %2008 = vmatpush1.msra.mxu0 0.0
    %2009 = vmatprep.subr.mxu0 0.0
    %2010 = vmatpush1.msra.mxu0 0.0
    %2011 = vmatprep.subr.mxu0 0.0
    %2012 = vmatpush1.msra.mxu0 0.0
    %2013 = vmatprep.subr.mxu0 0.0
    %2014 = vmatpush1.msra.mxu0 0.0
    %2015 = vmatprep.subr.mxu0 0.0
    %2016 = vmatpush1.msra.mxu0 0.0
    %2017 = vmatprep.subr.mxu0 0.0
    %2018 = vmatpush1.msra.mxu0 0.0
    %2019 = vmatprep.subr.mxu0 0.0
    %2020 = vmatpush1.msra.mxu0 0.0
    %2021 = vmatprep.subr.mxu0 0.0
    %2022 = vmatpush1.msra.mxu0 0.0
    %2023 = vmatprep.subr.mxu0 0.0
    %2024 = vmatpush1.msra.mxu0 0.0
    %2025 = vmatprep.subr.mxu0 0.0
    %2026 = vmatpush1.msra.mxu0 0.0
    %2027 = vmatprep.subr.mxu0 0.0
    %2028 = vmatpush1.msra.mxu0 0.0
    %2029 = vmatprep.subr.mxu0 0.0
    %2030 = vmatpush1.msra.mxu0 0.0
    %2031 = vmatprep.subr.mxu0 0.0
    %2032 = vmatpush1.msra.mxu0 0.0
    %2033 = vmatprep.subr.mxu0 0.0
    %2034 = vmatpush1.msra.mxu0 0.0
    %2035 = vmatprep.subr.mxu0 0.0
    %2036 = vmatpush1.msra.mxu0 0.0
    %2037 = vmatprep.subr.mxu0 0.0
    %2038 = vmatpush1.msra.mxu0 0.0
    %2039 = vmatprep.subr.mxu0 0.0
    %2040 = vmatpush1.msra.mxu0 0.0
    %2041 = vmatprep.subr.mxu0 0.0
    %2042 = vmatpush1.msra.mxu0 0.0
    %2043 = vmatprep.subr.mxu0 0.0
    %2044 = vmatpush1.msra.mxu0 0.0
    %2045 = vmatprep.subr.mxu0 0.0
    %2046 = vmatpush1.msra.mxu0 0.0
    %2047 = vmatprep.subr.mxu0 0.0
    %2048 = vmatpush1.msra.mxu0 0.0
    %2049 = vmatprep.subr.mxu0 0.0
    %2050 = vmatpush1.msra.mxu0 0.0
    %2051 = vmatprep.subr.mxu0 0.0
    %2052 = vmatpush1.msra.mxu0 0.0
    %2053 = vmatprep.subr.mxu0 0.0
    %2054 = vmatpush1.msra.mxu0 0.0
    %2055 = vmatprep.subr.mxu0 0.0
    %2056 = vmatpush1.msra.mxu0 0.0
    %2057 = vmatprep.subr.mxu0 0.0
    %2058 = vmatpush1.msra.mxu0 0.0
    %2059 = vmatprep.mubr.f32.mxu0 0.0
    %2060 = vmatmul.mubr.f32.gmra.mrb[0].mxu0 %v1891
    %v2061 = vpop.f32.mrb[0].mxu0
    %v2062 = vadd.f32 0.0, %v2061
    %v2063 = vpop.f32.mrb[0].mxu0
    %2064 = vmatprep.mubr.f32.mxu0 0.0
    %2065 = vmatmul.mubr.f32.gmra.mrb[0].mxu0 %v1894
    %v2066 = vpop.f32.mrb[0].mxu0
    %v2067 = vadd.f32 0.0, %v2066
    %v2068 = vpop.f32.mrb[0].mxu0
    %2069 = vmatprep.mubr.f32.mxu0 0.0
    %2070 = vmatmul.mubr.f32.gmra.mrb[0].mxu0 %v1897
    %v2071 = vpop.f32.mrb[0].mxu0
    %v2072 = vadd.f32 0.0, %v2071
    %v2073 = vpop.f32.mrb[0].mxu0
    %2074 = vmatprep.mubr.f32.mxu0 0.0
    %2075 = vmatmul.mubr.f32.gmra.mrb[0].mxu0 %v1900
    %v2076 = vpop.f32.mrb[0].mxu0
    %v2077 = vadd.f32 0.0, %v2076
    %v2078 = vpop.f32.mrb[0].mxu0
    %2079 = vdwg.mxu0
    %v2080 = vrcp.pop %v2062
    %v2081 = vmul.f32 %v1883, %v2080
    %v2082 = vrcp.pop %v2067
    %v2083 = vmul.f32 %v1885, %v2082
    %v2084 = vrcp.pop %v2072
    %v2085 = vmul.f32 %v1887, %v2084
    %v2086 = vrcp.pop %v2077
    %v2087 = vmul.f32 %v1889, %v2086
    %2089 = vset.pattern.permute.xlu0 0
    %2090 = vperm.xlu0 %2089, %v1988
    %v2091 = vpop.permute.xlu0 %2090
    %2094 = vset.pattern.permute.xlu0 0
    %2095 = vperm.xlu0 %2094, %v1990
    %v2096 = vpop.permute.xlu0 %2095
    %2099 = vset.pattern.permute.xlu0 0
    %2100 = vperm.xlu0 %2099, %v1992
    %v2101 = vpop.permute.xlu0 %2100
    %2104 = vset.pattern.permute.xlu0 0
    %2105 = vperm.xlu0 %2104, %v1994
    %v2106 = vpop.permute.xlu0 %2105
    %v2108 = vmul.f32 %v2091, %v1635
    %v2109 = vmul.f32 %v2091, %v1637
    %v2110 = vmul.f32 %v2096, %v1641
    %v2111 = vmul.f32 %v2096, %v1643
    %v2112 = vmul.f32 %v2101, %v1647
    %v2113 = vmul.f32 %v2101, %v1649
    %v2114 = vmul.f32 %v2106, %v1653
    %v2115 = vmul.f32 %v2106, %v1655
    %2117 = vset.pattern.permute.xlu0 0
    %2118 = vperm.xlu0 %2117, %v2081
    %v2119 = vpop.permute.xlu0 %2118
    %2122 = vset.pattern.permute.xlu0 0
    %2123 = vperm.xlu0 %2122, %v2083
    %v2124 = vpop.permute.xlu0 %2123
    %2127 = vset.pattern.permute.xlu0 0
    %2128 = vperm.xlu0 %2127, %v2085
    %v2129 = vpop.permute.xlu0 %2128
    %2132 = vset.pattern.permute.xlu0 0
    %2133 = vperm.xlu0 %2132, %v2087
    %v2134 = vpop.permute.xlu0 %2133
    %v2136 = vmul.f32 %v2119, %v1033
    %v2137 = vmul.f32 %v2119, %v1034
    %v2138 = vmul.f32 %v2124, %v1035
    %v2139 = vmul.f32 %v2124, %v1036
    %v2140 = vmul.f32 %v2129, %v1037
    %v2141 = vmul.f32 %v2129, %v1038
    %v2142 = vmul.f32 %v2134, %v1039
    %v2143 = vmul.f32 %v2134, %v1040
    %v2144 = vadd.f32 %v2108, %v2136
    %v2145 = vadd.f32 %v2109, %v2137
    %v2146 = vadd.f32 %v2110, %v2138
    %v2147 = vadd.f32 %v2111, %v2139
    %v2148 = vadd.f32 %v2112, %v2140
    %v2149 = vadd.f32 %v2113, %v2141
    %v2150 = vadd.f32 %v2114, %v2142
    %v2151 = vadd.f32 %v2115, %v2143
    %2152 = vmatprep.subr.mxu0 %v2145
    %2153 = vmatpush1.msra.mxu0 %v2144
    %2154 = vmatprep.subr.mxu0 %v2147
    %2155 = vmatpush1.msra.mxu0 %v2146
    %2156 = vmatprep.subr.mxu0 %v2149
    %2157 = vmatpush1.msra.mxu0 %v2148
    %2158 = vmatprep.subr.mxu0 %v2151
    %2159 = vmatpush1.msra.mxu0 %v2150
    %2160 = vmatprep.subr.mxu0 0.0
    %2161 = vmatpush1.msra.mxu0 0.0
    %2162 = vmatprep.subr.mxu0 0.0
    %2163 = vmatpush1.msra.mxu0 0.0
    %2164 = vmatprep.subr.mxu0 0.0
    %2165 = vmatpush1.msra.mxu0 0.0
    %2166 = vmatprep.subr.mxu0 0.0
    %2167 = vmatpush1.msra.mxu0 0.0
    %2168 = vmatprep.subr.mxu0 0.0
    %2169 = vmatpush1.msra.mxu0 0.0
    %2170 = vmatprep.subr.mxu0 0.0
    %2171 = vmatpush1.msra.mxu0 0.0
    %2172 = vmatprep.subr.mxu0 0.0
    %2173 = vmatpush1.msra.mxu0 0.0
    %2174 = vmatprep.subr.mxu0 0.0
    %2175 = vmatpush1.msra.mxu0 0.0
    %2176 = vmatprep.subr.mxu0 0.0
    %2177 = vmatpush1.msra.mxu0 0.0
    %2178 = vmatprep.subr.mxu0 0.0
    %2179 = vmatpush1.msra.mxu0 0.0
    %2180 = vmatprep.subr.mxu0 0.0
    %2181 = vmatpush1.msra.mxu0 0.0
    %2182 = vmatprep.subr.mxu0 0.0
    %2183 = vmatpush1.msra.mxu0 0.0
    %2184 = vmatprep.subr.mxu0 0.0
    %2185 = vmatpush1.msra.mxu0 0.0
    %2186 = vmatprep.subr.mxu0 0.0
    %2187 = vmatpush1.msra.mxu0 0.0
    %2188 = vmatprep.subr.mxu0 0.0
    %2189 = vmatpush1.msra.mxu0 0.0
    %2190 = vmatprep.subr.mxu0 0.0
    %2191 = vmatpush1.msra.mxu0 0.0
    %2192 = vmatprep.subr.mxu0 0.0
    %2193 = vmatpush1.msra.mxu0 0.0
    %2194 = vmatprep.subr.mxu0 0.0
    %2195 = vmatpush1.msra.mxu0 0.0
    %2196 = vmatprep.subr.mxu0 0.0
    %2197 = vmatpush1.msra.mxu0 0.0
    %2198 = vmatprep.subr.mxu0 0.0
    %2199 = vmatpush1.msra.mxu0 0.0
    %2200 = vmatprep.subr.mxu0 0.0
    %2201 = vmatpush1.msra.mxu0 0.0
    %2202 = vmatprep.subr.mxu0 0.0
    %2203 = vmatpush1.msra.mxu0 0.0
    %2204 = vmatprep.subr.mxu0 0.0
    %2205 = vmatpush1.msra.mxu0 0.0
    %2206 = vmatprep.subr.mxu0 0.0
    %2207 = vmatpush1.msra.mxu0 0.0
    %2208 = vmatprep.subr.mxu0 0.0
    %2209 = vmatpush1.msra.mxu0 0.0
    %2210 = vmatprep.subr.mxu0 0.0
    %2211 = vmatpush1.msra.mxu0 0.0
    %2212 = vmatprep.subr.mxu0 0.0
    %2213 = vmatpush1.msra.mxu0 0.0
    %2214 = vmatprep.subr.mxu0 0.0
    %2215 = vmatpush1.msra.mxu0 0.0
    %2216 = vmatprep.mubr.f32.mxu0 0.0
    %2217 = vmatmul.mubr.f32.gmra.mrb[0].mxu0 %v1891
    %v2218 = vpop.f32.mrb[0].mxu0
    %v2219 = vadd.f32 0.0, %v2218
    %v2220 = vpop.f32.mrb[0].mxu0
    %v2221 = vadd.f32 0.0, %v2220
    %2222 = vmatprep.mubr.f32.mxu0 0.0
    %2223 = vmatmul.mubr.f32.gmra.mrb[0].mxu0 %v1894
    %v2224 = vpop.f32.mrb[0].mxu0
    %v2225 = vadd.f32 0.0, %v2224
    %v2226 = vpop.f32.mrb[0].mxu0
    %v2227 = vadd.f32 0.0, %v2226
    %2228 = vmatprep.mubr.f32.mxu0 0.0
    %2229 = vmatmul.mubr.f32.gmra.mrb[0].mxu0 %v1897
    %v2230 = vpop.f32.mrb[0].mxu0
    %v2231 = vadd.f32 0.0, %v2230
    %v2232 = vpop.f32.mrb[0].mxu0
    %v2233 = vadd.f32 0.0, %v2232
    %2234 = vmatprep.mubr.f32.mxu0 0.0
    %2235 = vmatmul.mubr.f32.gmra.mrb[0].mxu0 %v1900
    %v2236 = vpop.f32.mrb[0].mxu0
    %v2237 = vadd.f32 0.0, %v2236
    %v2238 = vpop.f32.mrb[0].mxu0
    %v2239 = vadd.f32 0.0, %v2238
    %2240 = vdwg.mxu0
    %v2241 = vxor.u32 %v2219, 2147483648
    %v2242 = vxor.u32 %v2221, 2147483648
    %v2243 = vxor.u32 %v2225, 2147483648
    %v2244 = vxor.u32 %v2227, 2147483648
    %v2245 = vxor.u32 %v2231, 2147483648
    %v2246 = vxor.u32 %v2233, 2147483648
    %v2247 = vxor.u32 %v2237, 2147483648
    %v2248 = vxor.u32 %v2239, 2147483648
    %v2249 = vmul.f32 %v2241, 1.442695
    %v2250 = vpow.pop %v2249
    %v2251 = vmul.f32 %v2242, 1.442695
    %v2252 = vpow.pop %v2251
    %v2253 = vmul.f32 %v2243, 1.442695
    %v2254 = vpow.pop %v2253
    %v2255 = vmul.f32 %v2244, 1.442695
    %v2256 = vpow.pop %v2255
    %v2257 = vmul.f32 %v2245, 1.442695
    %v2258 = vpow.pop %v2257
    %v2259 = vmul.f32 %v2246, 1.442695
    %v2260 = vpow.pop %v2259
    %v2261 = vmul.f32 %v2247, 1.442695
    %v2262 = vpow.pop %v2261
    %v2263 = vmul.f32 %v2248, 1.442695
    %v2264 = vpow.pop %v2263
    %v2265 = vadd.f32 %v2250, 1.0
    %v2266 = vadd.f32 %v2252, 1.0
    %v2267 = vadd.f32 %v2254, 1.0
    %v2268 = vadd.f32 %v2256, 1.0
    %v2269 = vadd.f32 %v2258, 1.0
    %v2270 = vadd.f32 %v2260, 1.0
    %v2271 = vadd.f32 %v2262, 1.0
    %v2272 = vadd.f32 %v2264, 1.0
    %v2273 = vrcp.pop %v2265
    %v2274 = vmul.f32 1.0, %v2273
    %v2275 = vrcp.pop %v2266
    %v2276 = vmul.f32 1.0, %v2275
    %v2277 = vrcp.pop %v2267
    %v2278 = vmul.f32 1.0, %v2277
    %v2279 = vrcp.pop %v2268
    %v2280 = vmul.f32 1.0, %v2279
    %v2281 = vrcp.pop %v2269
    %v2282 = vmul.f32 1.0, %v2281
    %v2283 = vrcp.pop %v2270
    %v2284 = vmul.f32 1.0, %v2283
    %v2285 = vrcp.pop %v2271
    %v2286 = vmul.f32 1.0, %v2285
    %v2287 = vrcp.pop %v2272
    %v2288 = vmul.f32 1.0, %v2287
    %v2289 = vmul.f32 %v48, %v2274
    %v2290 = vmul.f32 %v49, %v2276
    %v2291 = vmul.f32 %v50, %v2278
    %v2292 = vmul.f32 %v51, %v2280
    %v2293 = vmul.f32 %v52, %v2282
    %v2294 = vmul.f32 %v53, %v2284
    %v2295 = vmul.f32 %v54, %v2286
    %v2296 = vmul.f32 %v55, %v2288
    %2297 = vst [vmem:[#allocation2] sm:$0xff] %v2289
    %2298 = vst [vmem:[#allocation2 + $0x8] sm:$0xff] %v2290
    %2299 = vst [vmem:[#allocation2 + $0x10] sm:$0xff] %v2291
    %2300 = vst [vmem:[#allocation2 + $0x18] sm:$0xff] %v2292
    %2301 = vst [vmem:[#allocation2 + $0x20] sm:$0xff] %v2293
    %2302 = vst [vmem:[#allocation2 + $0x28] sm:$0xff] %v2294
    %2303 = vst [vmem:[#allocation2 + $0x30] sm:$0xff] %v2295
    %2304 = vst [vmem:[#allocation2 + $0x38] sm:$0xff] %v2296
    // Predicated region
    $region58: #{tpu_custom_call.1} parent=1 // pred_check
      _
    $region59: #{tpu_custom_call.1} parent=1 // pred_check_branch
      %2306 = sbr.rel (0) target = $region61
    $region60: #{tpu_custom_call.1} parent=1 // pred_region
      %s2308 = ssub.s32 1024, 1024
      %2309 = vsyncadd [#allocation3], %s2308
      %s2310 = sshll.u32 [#allocation2], 4
      %s2311 = int_to_ptr.vmem [resolvable:$true] %s2310
      %2316 = dma.vmem_to_hbm [thread:$0]  %s2311, 1024, %s14, [#allocation3], 256, 256, 16
    $region61: #{tpu_custom_call.1} parent=1 // pred_fallthru
      _
    // Predicated region
    $region62: #{tpu_custom_call.1} parent=1 // pred_check
      _
    $region63: #{tpu_custom_call.1} parent=1 // pred_check_branch
      %2318 = sbr.rel (0) target = $region65
    $region64: #{tpu_custom_call.1} parent=1 // pred_region
      %2319 = dma.done [#allocation3], 1024
    $region65: #{tpu_custom_call.1} parent=1 // pred_fallthru
      _
    %2320 = vsyncpa [#allocation3], 1

</llo_original>
